<compile_context>
chip_gen: v6e
topology: v6e:2x2x1
jax: 0.10.0
libtpu: 0.0.40
codegen_flags: <defaults>
</compile_context>

<pallas_src>
import functools

import jax
import jax.numpy as jnp
from jax.experimental import pallas as pl
from jax.experimental.pallas import tpu as pltpu


def _round_up(x, m):
    return (x + m - 1) // m * m


def _choose_tm(bs):
    # Aim for >= 2 grid steps (v7x megacore + pipeline overlap) while keeping
    # 16-row sublane alignment (bf16 tiles) and capping at a full 128-row tile.
    half = max((bs + 1) // 2, 1)
    return min(128, _round_up(half, 16))


def _pad_cast_2d(a, rows, cols, dtype):
    """Cast to `dtype` and zero-pad to (rows, cols); no copy if already sized."""
    r, c = a.shape
    a = a.astype(dtype)
    if (r, c) == (rows, cols):
        return a
    return jnp.zeros((rows, cols), dtype).at[:r, :c].set(a)


# --------------------------------------------------------------------------
# Kernel: one batch tile does the whole encoder -> reparam -> decoder chain.
# --------------------------------------------------------------------------
def _vae_kernel(x_ref, eps_ref,
                w1_ref, b1_ref,
                wmulv_ref, bmulv_ref,
                w2_ref, b2_ref,
                w3_ref, b3_ref,
                recon_ref, mulv_ref, *, lp):
    bf16 = jnp.bfloat16

    # ---- encoder trunk: h = relu(x @ w1 + b1) ----
    x = x_ref[...]                                                       # (TM, Dp) bf16
    h = jnp.dot(x, w1_ref[...], preferred_element_type=jnp.float32) + b1_ref[...]
    h = jnp.maximum(h, 0.0)                                              # (TM, Hp) f32

    # ---- fused mu|logvar head: one lane-dense (Hp, 2*LP) matmul ----
    mulv = jnp.dot(h.astype(bf16), wmulv_ref[...],
                   preferred_element_type=jnp.float32) + bmulv_ref[...]  # (TM, 2*LP)
    mu = mulv[:, :lp]                                                    # lane-aligned slice
    lv = mulv[:, lp:]

    # ---- reparameterization (padded lanes: mu=0, lv=0, eps=0 -> z=0) ----
    z = mu + jnp.exp(0.5 * lv) * eps_ref[...]                            # (TM, LP) f32

    # ---- decoder ----
    h2 = jnp.dot(z.astype(bf16), w2_ref[...],
                 preferred_element_type=jnp.float32) + b2_ref[...]
    h2 = jnp.maximum(h2, 0.0)                                            # (TM, Hp) f32
    logits = jnp.dot(h2.astype(bf16), w3_ref[...],
                     preferred_element_type=jnp.float32) + b3_ref[...]

    recon_ref[...] = jax.nn.sigmoid(logits).astype(recon_ref.dtype)      # (TM, Dp) bf16
    mulv_ref[...] = mulv                                                 # (TM, 2*LP) f32


# --------------------------------------------------------------------------
# One-time parameter preparation (call OUTSIDE the jitted forward).
# --------------------------------------------------------------------------
def prepare_params(params):
    """Pad to MXU-friendly shapes and cast weights to bf16 (biases stay f32)."""
    w1, b1, wmu, bmu, wlv, blv, w2, b2, w3, b3 = params
    d, hidden = w1.shape
    latent = wmu.shape[1]
    dp, hp, lp = _round_up(d, 128), _round_up(hidden, 128), _round_up(latent, 128)
    f32, bf16 = jnp.float32, jnp.bfloat16

    w1_p = jnp.zeros((dp, hp), bf16).at[:d, :hidden].set(w1.astype(bf16))
    b1_p = jnp.zeros((1, hp), f32).at[:, :hidden].set(b1.reshape(1, hidden).astype(f32))
    wmulv_p = (jnp.zeros((hp, 2 * lp), bf16)
               .at[:hidden, :latent].set(wmu.astype(bf16))
               .at[:hidden, lp:lp + latent].set(wlv.astype(bf16)))
    bmulv_p = (jnp.zeros((1, 2 * lp), f32)
               .at[:, :latent].set(bmu.reshape(1, latent).astype(f32))
               .at[:, lp:lp + latent].set(blv.reshape(1, latent).astype(f32)))
    w2_p = jnp.zeros((lp, hp), bf16).at[:latent, :hidden].set(w2.astype(bf16))
    b2_p = jnp.zeros((1, hp), f32).at[:, :hidden].set(b2.reshape(1, hidden).astype(f32))
    w3_p = jnp.zeros((hp, dp), bf16).at[:hidden, :d].set(w3.astype(bf16))
    b3_p = jnp.zeros((1, dp), f32).at[:, :d].set(b3.reshape(1, d).astype(f32))
    return (w1_p, b1_p, wmulv_p, bmulv_p, w2_p, b2_p, w3_p, b3_p)


# --------------------------------------------------------------------------
# Forward wrapper.
# --------------------------------------------------------------------------
def vae_forward(x_nchw, eps, prepared):
    """x_nchw: (B,C,H,W) f32.  eps: (B,L) f32.  prepared: prepare_params(...)."""
    bs, c, hh, ww = x_nchw.shape
    d = c * hh * ww
    latent = eps.shape[1]
    (w1_p, b1_p, wmulv_p, bmulv_p, w2_p, b2_p, w3_p, b3_p) = prepared
    dp, hp = w1_p.shape
    lp = w2_p.shape[0]

    f32, bf16 = jnp.float32, jnp.bfloat16
    tm = _choose_tm(bs)
    bp = _round_up(bs, tm)
    grid = (bp // tm,)

    # Minimal activation padding: batch to a multiple of TM (tiny at small B),
    # features/latent to lane multiples of 128.  x is cast to bf16 here so the
    # dominant input stream is half-width.
    x_p = _pad_cast_2d(x_nchw.reshape(bs, d), bp, dp, bf16)
    eps_p = _pad_cast_2d(eps, bp, lp, f32)

    def tile_m(cols):
        return pl.BlockSpec((tm, cols), lambda i: (i, 0))

    def resident(shape):
        # Constant index map -> VMEM-resident across grid steps; single buffer
        # (no point double-buffering something that is never re-fetched).
        return pl.BlockSpec(shape, lambda i: (0, 0), pipeline_mode=pl.Buffered(1))

    in_specs = [
        tile_m(dp),               # x (bf16)
        tile_m(lp),               # eps (f32)
        resident((dp, hp)),       # w1
        resident((1, hp)),        # b1
        resident((hp, 2 * lp)),   # wmu|wlv fused
        resident((1, 2 * lp)),    # bmu|blv fused
        resident((lp, hp)),       # w2
        resident((1, hp)),        # b2
        resident((hp, dp)),       # w3
        resident((1, dp)),        # b3
    ]
    out_specs = (
        tile_m(dp),               # recon (bf16, lane-dense)
        tile_m(2 * lp),           # mu|logvar slab (f32, lane-dense)
    )
    out_shapes = (
        jax.ShapeDtypeStruct((bp, dp), bf16),
        jax.ShapeDtypeStruct((bp, 2 * lp), f32),
    )

    recon_p, mulv_p = pl.pallas_call(
        functools.partial(_vae_kernel, lp=lp),
        grid=grid,
        in_specs=in_specs,
        out_specs=out_specs,
        out_shape=out_shapes,
        compiler_params=pltpu.CompilerParams(
            dimension_semantics=("parallel",),     # megacore split on v7x
            vmem_limit_bytes=16 << 20,             # footprint is well under this
        ),
    )(x_p, eps_p, w1_p, b1_p, wmulv_p, bmulv_p, w2_p, b2_p, w3_p, b3_p)

    recon = recon_p[:bs, :d].astype(f32).reshape(bs, c, hh, ww)
    mu = mulv_p[:bs, :latent]
    log_var = mulv_p[:bs, lp:lp + latent]
    return recon, mu, log_var


# --------------------------------------------------------------------------
# Parameter init + pure-JAX reference for checking.
# --------------------------------------------------------------------------
def init_params(key, d, hidden, latent):
    ks = jax.random.split(key, 5)
    scale = 0.02
    w1 = scale * jax.random.normal(ks[0], (d, hidden), jnp.float32)
    b1 = jnp.zeros((1, hidden), jnp.float32)
    wmu = scale * jax.random.normal(ks[1], (hidden, latent), jnp.float32)
    bmu = jnp.zeros((1, latent), jnp.float32)
    wlv = scale * jax.random.normal(ks[2], (hidden, latent), jnp.float32)
    blv = jnp.zeros((1, latent), jnp.float32)
    w2 = scale * jax.random.normal(ks[3], (latent, hidden), jnp.float32)
    b2 = jnp.zeros((1, hidden), jnp.float32)
    w3 = scale * jax.random.normal(ks[4], (hidden, d), jnp.float32)
    b3 = jnp.zeros((1, d), jnp.float32)
    return (w1, b1, wmu, bmu, wlv, blv, w2, b2, w3, b3)


def _ref_forward(x, eps, params):
    """Pure-JAX reference with the same bf16-weight / f32-accumulate math."""
    w1, b1, wmu, bmu, wlv, blv, w2, b2, w3, b3 = params
    bf = jnp.bfloat16
    bs = x.shape[0]
    xf = x.reshape(bs, -1)
    h = jnp.maximum(jnp.dot(xf.astype(bf), w1.astype(bf),
                            preferred_element_type=jnp.float32) + b1, 0.0)
    mu = jnp.dot(h.astype(bf), wmu.astype(bf),
                 preferred_element_type=jnp.float32) + bmu
    lv = jnp.dot(h.astype(bf), wlv.astype(bf),
                 preferred_element_type=jnp.float32) + blv
    z = mu + jnp.exp(0.5 * lv) * eps
    h2 = jnp.maximum(jnp.dot(z.astype(bf), w2.astype(bf),
                             preferred_element_type=jnp.float32) + b2, 0.0)
    logits = jnp.dot(h2.astype(bf), w3.astype(bf),
                     preferred_element_type=jnp.float32) + b3
    return jax.nn.sigmoid(logits).reshape(x.shape), mu, lv


if __name__ == "__main__":
    key = jax.random.PRNGKey(0)
    k_x, k_eps, k_p = jax.random.split(key, 3)

    B, C, H, W = 2, 4, 16, 16          # input (B, C, H, W), D = 1024
    HIDDEN, LATENT = 128, 32

    x = jax.random.normal(k_x, (B, C, H, W), jnp.float32)
    eps = jax.random.normal(k_eps, (B, LATENT), jnp.float32)
    params = init_params(k_p, C * H * W, HIDDEN, LATENT)

    # Pad/cast the weights exactly once, outside the jitted forward.
    prepared = jax.block_until_ready(prepare_params(params))

    recon, mu, log_var = jax.jit(vae_forward)(x, eps, prepared)
    jax.block_until_ready((recon, mu, log_var))

    assert recon.shape == (B, C, H, W)
    assert mu.shape == (B, LATENT)
    assert log_var.shape == (B, LATENT)

    rec_ref, mu_ref, lv_ref = _ref_forward(x, eps, params)
    # recon is stored as bf16 by the kernel -> looser tolerance on recon only.
    assert jnp.allclose(recon, rec_ref, atol=8e-3, rtol=8e-3)
    assert jnp.allclose(mu, mu_ref, atol=2e-3, rtol=2e-3)
    assert jnp.allclose(log_var, lv_ref, atol=2e-3, rtol=2e-3)

    print("KERNEL_OK")
</pallas_src>

<mosaic_0001>
module attributes {stable_mosaic.version = 11 : i64} {
  func.func @_vae_kernel(%arg0: i32, %arg1: memref<16x1024xbf16, #tpu.memory_space<vmem>>, %arg2: memref<16x128xf32, #tpu.memory_space<vmem>>, %arg3: memref<1024x128xbf16, #tpu.memory_space<vmem>>, %arg4: memref<1x128xf32, #tpu.memory_space<vmem>>, %arg5: memref<128x256xbf16, #tpu.memory_space<vmem>>, %arg6: memref<1x256xf32, #tpu.memory_space<vmem>>, %arg7: memref<128x128xbf16, #tpu.memory_space<vmem>>, %arg8: memref<1x128xf32, #tpu.memory_space<vmem>>, %arg9: memref<128x1024xbf16, #tpu.memory_space<vmem>>, %arg10: memref<1x1024xf32, #tpu.memory_space<vmem>>, %arg11: memref<16x1024xbf16, #tpu.memory_space<vmem>>, %arg12: memref<16x256xf32, #tpu.memory_space<vmem>>) attributes {dimension_semantics = [#tpu.dimension_semantics<parallel>], iteration_bounds = array<i64: 1>, scalar_prefetch = 0 : i64, scratch_operands = 0 : i64, tpu.core_type = #tpu.core_type<tc>, window_params = [{transform_indices = @transform_0, window_bounds = array<i64: 16, 1024>}, {transform_indices = @transform_1, window_bounds = array<i64: 16, 128>}, {pipeline_mode = #tpu.pipeline_mode<synchronous>, transform_indices = @transform_2, window_bounds = array<i64: 1024, 128>}, {pipeline_mode = #tpu.pipeline_mode<synchronous>, transform_indices = @transform_3, window_bounds = array<i64: 1, 128>}, {pipeline_mode = #tpu.pipeline_mode<synchronous>, transform_indices = @transform_4, window_bounds = array<i64: 128, 256>}, {pipeline_mode = #tpu.pipeline_mode<synchronous>, transform_indices = @transform_5, window_bounds = array<i64: 1, 256>}, {pipeline_mode = #tpu.pipeline_mode<synchronous>, transform_indices = @transform_6, window_bounds = array<i64: 128, 128>}, {pipeline_mode = #tpu.pipeline_mode<synchronous>, transform_indices = @transform_7, window_bounds = array<i64: 1, 128>}, {pipeline_mode = #tpu.pipeline_mode<synchronous>, transform_indices = @transform_8, window_bounds = array<i64: 128, 1024>}, {pipeline_mode = #tpu.pipeline_mode<synchronous>, transform_indices = @transform_9, window_bounds = array<i64: 1, 1024>}, {transform_indices = @transform_10, window_bounds = array<i64: 16, 1024>}, {transform_indices = @transform_11, window_bounds = array<i64: 16, 256>}]} {
    %c0 = arith.constant 0 : index
    %c0_0 = arith.constant 0 : index
    %0 = vector.load %arg1[%c0, %c0_0] : memref<16x1024xbf16, #tpu.memory_space<vmem>>, vector<16x1024xbf16>
    %c0_1 = arith.constant 0 : index
    %c0_2 = arith.constant 0 : index
    %1 = vector.load %arg3[%c0_1, %c0_2] : memref<1024x128xbf16, #tpu.memory_space<vmem>>, vector<1024x128xbf16>
    %cst = arith.constant dense<0.000000e+00> : vector<16x128xf32>
    %2 = tpu.matmul %0, %1, %cst {dimension_numbers = #tpu.dot_dimension_numbers<[1], [0], [0], [1], [0, 0, 1, 1], [], []>} : vector<16x1024xbf16>, vector<1024x128xbf16>, vector<16x128xf32> -> vector<16x128xf32>
    %c0_3 = arith.constant 0 : index
    %c0_4 = arith.constant 0 : index
    %3 = vector.load %arg4[%c0_3, %c0_4] : memref<1x128xf32, #tpu.memory_space<vmem>>, vector<1x128xf32>
    %4 = vector.broadcast %3 : vector<1x128xf32> to vector<16x128xf32>
    %5 = arith.addf %2, %4 : vector<16x128xf32>
    %cst_5 = arith.constant 0.000000e+00 : f32
    %6 = vector.broadcast %cst_5 : f32 to vector<16x128xf32>
    %7 = arith.maximumf %5, %6 : vector<16x128xf32>
    %8 = arith.truncf %7 : vector<16x128xf32> to vector<16x128xbf16>
    %c0_6 = arith.constant 0 : index
    %c0_7 = arith.constant 0 : index
    %9 = vector.load %arg5[%c0_6, %c0_7] : memref<128x256xbf16, #tpu.memory_space<vmem>>, vector<128x256xbf16>
    %cst_8 = arith.constant dense<0.000000e+00> : vector<16x256xf32>
    %10 = tpu.matmul %8, %9, %cst_8 {dimension_numbers = #tpu.dot_dimension_numbers<[1], [0], [0], [1], [0, 0, 1, 1], [], []>} : vector<16x128xbf16>, vector<128x256xbf16>, vector<16x256xf32> -> vector<16x256xf32>
    %c0_9 = arith.constant 0 : index
    %c0_10 = arith.constant 0 : index
    %11 = vector.load %arg6[%c0_9, %c0_10] : memref<1x256xf32, #tpu.memory_space<vmem>>, vector<1x256xf32>
    %12 = vector.broadcast %11 : vector<1x256xf32> to vector<16x256xf32>
    %13 = arith.addf %10, %12 : vector<16x256xf32>
    %14 = vector.extract_strided_slice %13 {offsets = [0, 0], sizes = [16, 128], strides = [1, 1]} : vector<16x256xf32> to vector<16x128xf32>
    %15 = vector.extract_strided_slice %13 {offsets = [0, 128], sizes = [16, 128], strides = [1, 1]} : vector<16x256xf32> to vector<16x128xf32>
    %cst_11 = arith.constant 5.000000e-01 : f32
    %16 = vector.broadcast %cst_11 : f32 to vector<16x128xf32>
    %17 = arith.mulf %16, %15 : vector<16x128xf32>
    %18 = math.exp %17 : vector<16x128xf32>
    %c0_12 = arith.constant 0 : index
    %c0_13 = arith.constant 0 : index
    %19 = vector.load %arg2[%c0_12, %c0_13] : memref<16x128xf32, #tpu.memory_space<vmem>>, vector<16x128xf32>
    %20 = arith.mulf %18, %19 : vector<16x128xf32>
    %21 = arith.addf %14, %20 : vector<16x128xf32>
    %22 = arith.truncf %21 : vector<16x128xf32> to vector<16x128xbf16>
    %c0_14 = arith.constant 0 : index
    %c0_15 = arith.constant 0 : index
    %23 = vector.load %arg7[%c0_14, %c0_15] : memref<128x128xbf16, #tpu.memory_space<vmem>>, vector<128x128xbf16>
    %cst_16 = arith.constant dense<0.000000e+00> : vector<16x128xf32>
    %24 = tpu.matmul %22, %23, %cst_16 {dimension_numbers = #tpu.dot_dimension_numbers<[1], [0], [0], [1], [0, 0, 1, 1], [], []>} : vector<16x128xbf16>, vector<128x128xbf16>, vector<16x128xf32> -> vector<16x128xf32>
    %c0_17 = arith.constant 0 : index
    %c0_18 = arith.constant 0 : index
    %25 = vector.load %arg8[%c0_17, %c0_18] : memref<1x128xf32, #tpu.memory_space<vmem>>, vector<1x128xf32>
    %26 = vector.broadcast %25 : vector<1x128xf32> to vector<16x128xf32>
    %27 = arith.addf %24, %26 : vector<16x128xf32>
    %cst_19 = arith.constant 0.000000e+00 : f32
    %28 = vector.broadcast %cst_19 : f32 to vector<16x128xf32>
    %29 = arith.maximumf %27, %28 : vector<16x128xf32>
    %30 = arith.truncf %29 : vector<16x128xf32> to vector<16x128xbf16>
    %c0_20 = arith.constant 0 : index
    %c0_21 = arith.constant 0 : index
    %31 = vector.load %arg9[%c0_20, %c0_21] : memref<128x1024xbf16, #tpu.memory_space<vmem>>, vector<128x1024xbf16>
    %cst_22 = arith.constant dense<0.000000e+00> : vector<16x1024xf32>
    %32 = tpu.matmul %30, %31, %cst_22 {dimension_numbers = #tpu.dot_dimension_numbers<[1], [0], [0], [1], [0, 0, 1, 1], [], []>} : vector<16x128xbf16>, vector<128x1024xbf16>, vector<16x1024xf32> -> vector<16x1024xf32>
    %c0_23 = arith.constant 0 : index
    %c0_24 = arith.constant 0 : index
    %33 = vector.load %arg10[%c0_23, %c0_24] : memref<1x1024xf32, #tpu.memory_space<vmem>>, vector<1x1024xf32>
    %34 = vector.broadcast %33 : vector<1x1024xf32> to vector<16x1024xf32>
    %35 = arith.addf %32, %34 : vector<16x1024xf32>
    %36 = arith.negf %35 : vector<16x1024xf32>
    %37 = math.exp %36 : vector<16x1024xf32>
    %cst_25 = arith.constant 1.000000e+00 : f32
    %38 = vector.broadcast %cst_25 : f32 to vector<16x1024xf32>
    %39 = arith.addf %38, %37 : vector<16x1024xf32>
    %40 = arith.divf %38, %39 : vector<16x1024xf32>
    %41 = arith.truncf %40 : vector<16x1024xf32> to vector<16x1024xbf16>
    %c0_26 = arith.constant 0 : index
    %c0_27 = arith.constant 0 : index
    %42 = vector.load %arg11[%c0_26, %c0_27] : memref<16x1024xbf16, #tpu.memory_space<vmem>>, vector<16x1024xbf16>
    tpu.vector_store %arg11[%c0_26, %c0_27], %41 {strides = array<i32>} : memref<16x1024xbf16, #tpu.memory_space<vmem>>, vector<16x1024xbf16>,
    %c0_28 = arith.constant 0 : index
    %c0_29 = arith.constant 0 : index
    %43 = vector.load %arg12[%c0_28, %c0_29] : memref<16x256xf32, #tpu.memory_space<vmem>>, vector<16x256xf32>
    tpu.vector_store %arg12[%c0_28, %c0_29], %13 {strides = array<i32>} : memref<16x256xf32, #tpu.memory_space<vmem>>, vector<16x256xf32>,
    return
  }
  func.func @transform_0(%arg0: i32) -> (i32, i32) {
    %c0_i32 = arith.constant 0 : i32
    %c0_i32_0 = arith.constant 0 : i32
    return %arg0, %c0_i32 : i32, i32
  }
  func.func @transform_1(%arg0: i32) -> (i32, i32) {
    %c0_i32 = arith.constant 0 : i32
    %c0_i32_0 = arith.constant 0 : i32
    return %arg0, %c0_i32 : i32, i32
  }
  func.func @transform_2(%arg0: i32) -> (i32, i32) {
    %c0_i32 = arith.constant 0 : i32
    %c0_i32_0 = arith.constant 0 : i32
    %c0_i32_1 = arith.constant 0 : i32
    return %c0_i32, %c0_i32_0 : i32, i32
  }
  func.func @transform_3(%arg0: i32) -> (i32, i32) {
    %c0_i32 = arith.constant 0 : i32
    %c0_i32_0 = arith.constant 0 : i32
    %c0_i32_1 = arith.constant 0 : i32
    return %c0_i32, %c0_i32_0 : i32, i32
  }
  func.func @transform_4(%arg0: i32) -> (i32, i32) {
    %c0_i32 = arith.constant 0 : i32
    %c0_i32_0 = arith.constant 0 : i32
    %c0_i32_1 = arith.constant 0 : i32
    return %c0_i32, %c0_i32_0 : i32, i32
  }
  func.func @transform_5(%arg0: i32) -> (i32, i32) {
    %c0_i32 = arith.constant 0 : i32
    %c0_i32_0 = arith.constant 0 : i32
    %c0_i32_1 = arith.constant 0 : i32
    return %c0_i32, %c0_i32_0 : i32, i32
  }
  func.func @transform_6(%arg0: i32) -> (i32, i32) {
    %c0_i32 = arith.constant 0 : i32
    %c0_i32_0 = arith.constant 0 : i32
    %c0_i32_1 = arith.constant 0 : i32
    return %c0_i32, %c0_i32_0 : i32, i32
  }
  func.func @transform_7(%arg0: i32) -> (i32, i32) {
    %c0_i32 = arith.constant 0 : i32
    %c0_i32_0 = arith.constant 0 : i32
    %c0_i32_1 = arith.constant 0 : i32
    return %c0_i32, %c0_i32_0 : i32, i32
  }
  func.func @transform_8(%arg0: i32) -> (i32, i32) {
    %c0_i32 = arith.constant 0 : i32
    %c0_i32_0 = arith.constant 0 : i32
    %c0_i32_1 = arith.constant 0 : i32
    return %c0_i32, %c0_i32_0 : i32, i32
  }
  func.func @transform_9(%arg0: i32) -> (i32, i32) {
    %c0_i32 = arith.constant 0 : i32
    %c0_i32_0 = arith.constant 0 : i32
    %c0_i32_1 = arith.constant 0 : i32
    return %c0_i32, %c0_i32_0 : i32, i32
  }
  func.func @transform_10(%arg0: i32) -> (i32, i32) {
    %c0_i32 = arith.constant 0 : i32
    %c0_i32_0 = arith.constant 0 : i32
    return %arg0, %c0_i32 : i32, i32
  }
  func.func @transform_11(%arg0: i32) -> (i32, i32) {
    %c0_i32 = arith.constant 0 : i32
    %c0_i32_0 = arith.constant 0 : i32
    return %arg0, %c0_i32 : i32, i32
  }
}

</mosaic_0001>

<llo_original>
// kernel: vae_forward.1
$region0: #{vae_forward.1}
  #allocation0 [shape = 'u32[]', space=smem, size = 0x4, offset = 0x4, fixed_abs, tag = 'smem constant byte address 0x4 - core index']
  #allocation1 [shape = 'u32[144,128]{1,0:T(1,128)}', space=vmem, size = 0x12000, scoped, tag = 'internal scratch']
  %s0 = inlined_call_operand.vmem [shape: bf16[16,1024], index: 0, kind: input, shape index: {}]
  %s1 = inlined_call_operand.vmem [shape: f32[16,128], index: 1, kind: input, shape index: {}]
  %s2 = inlined_call_operand.hbm [shape: bf16[1024,128], index: 2, kind: input, shape index: {}]
  %s3 = inlined_call_operand.vmem [shape: f32[1,128], index: 3, kind: input, shape index: {}]
  %s4 = inlined_call_operand.vmem [shape: bf16[128,256], index: 4, kind: input, shape index: {}]
  %s5 = inlined_call_operand.vmem [shape: f32[1,256], index: 5, kind: input, shape index: {}]
  %s6 = inlined_call_operand.vmem [shape: bf16[128,128], index: 6, kind: input, shape index: {}]
  %s7 = inlined_call_operand.vmem [shape: f32[1,128], index: 7, kind: input, shape index: {}]
  %s8 = inlined_call_operand.hbm [shape: bf16[128,1024], index: 8, kind: input, shape index: {}]
  %s9 = inlined_call_operand.vmem [shape: f32[1,1024], index: 9, kind: input, shape index: {}]
  %s10 = inlined_call_operand.vmem [shape: bf16[16,1024], index: 10, kind: output, shape index: {0}]
  %s11 = inlined_call_operand.vmem [shape: f32[16,256], index: 11, kind: output, shape index: {1}]
  %12 = xla_tuple %s10, %s11
  %s13 = sld [smem:[#allocation0]]
  $region66: #{vae_forward.1} parent=0
    _
  %s15 = ssub.s32 1, %s13
  %s16 = scalar_select 0, %s15, %s13
  $region1: #{vae_forward.1} parent=0
    #allocation2 [shape = 'u8[262144]{0}', space=vmem, size = 0x40000, scoped, tag = 'input window, operand 2, single buffered']
    #allocation3 [shape = 's32[1]{0}', space=sflag, size = 0x4, scoped, tag = 'scoped memory for vae_forward.1']
    #allocation4 [shape = 'u8[262144]{0}', space=vmem, size = 0x40000, scoped, tag = 'input window, operand 8, single buffered']
    #allocation5 [shape = 's32[1]{0}', space=sflag, size = 0x4, scoped, tag = 'scoped memory for vae_forward.1']
    %17 = vsyncpa [#allocation3], 0
    %18 = vsyncpa [#allocation5], 0
    // Predicated region
    $region2: #{vae_forward.1} parent=1 // pred_check
      _
    $region3: #{vae_forward.1} parent=1 // pred_check_branch
      %20 = sbr.rel (0) target = $region5
    $region4: #{vae_forward.1} parent=1 // pred_region
      _
    $region5: #{vae_forward.1} parent=1 // pred_fallthru
      _
    // Predicated region
    $region6: #{vae_forward.1} parent=1 // pred_check
      _
    $region7: #{vae_forward.1} parent=1 // pred_check_branch
      %22 = sbr.rel (0) target = $region9
    $region8: #{vae_forward.1} parent=1 // pred_region
      _
    $region9: #{vae_forward.1} parent=1 // pred_fallthru
      _
    // Predicated region
    $region10: #{vae_forward.1} parent=1 // pred_check
      _
    $region11: #{vae_forward.1} parent=1 // pred_check_branch
      %24 = sbr.rel (0) target = $region13
    $region12: #{vae_forward.1} parent=1 // pred_region
      %s26 = ssub.s32 8192, 8192
      %27 = vsyncadd [#allocation3], %s26
      %s28 = sshll.u32 [#allocation2], 4
      %s29 = int_to_ptr.vmem [resolvable:$true] %s28
      %34 = dma.hbm_to_vmem [thread:$0]  %s2, 8192, %s29, [#allocation3], 64, 64, 4
    $region13: #{vae_forward.1} parent=1 // pred_fallthru
      _
    // Predicated region
    $region14: #{vae_forward.1} parent=1 // pred_check
      _
    $region15: #{vae_forward.1} parent=1 // pred_check_branch
      %36 = sbr.rel (0) target = $region17
    $region16: #{vae_forward.1} parent=1 // pred_region
      _
    $region17: #{vae_forward.1} parent=1 // pred_fallthru
      _
    // Predicated region
    $region18: #{vae_forward.1} parent=1 // pred_check
      _
    $region19: #{vae_forward.1} parent=1 // pred_check_branch
      %38 = sbr.rel (0) target = $region21
    $region20: #{vae_forward.1} parent=1 // pred_region
      _
    $region21: #{vae_forward.1} parent=1 // pred_fallthru
      _
    // Predicated region
    $region22: #{vae_forward.1} parent=1 // pred_check
      _
    $region23: #{vae_forward.1} parent=1 // pred_check_branch
      %40 = sbr.rel (0) target = $region25
    $region24: #{vae_forward.1} parent=1 // pred_region
      _
    $region25: #{vae_forward.1} parent=1 // pred_fallthru
      _
    // Predicated region
    $region26: #{vae_forward.1} parent=1 // pred_check
      _
    $region27: #{vae_forward.1} parent=1 // pred_check_branch
      %42 = sbr.rel (0) target = $region29
    $region28: #{vae_forward.1} parent=1 // pred_region
      _
    $region29: #{vae_forward.1} parent=1 // pred_fallthru
      _
    // Predicated region
    $region30: #{vae_forward.1} parent=1 // pred_check
      _
    $region31: #{vae_forward.1} parent=1 // pred_check_branch
      %44 = sbr.rel (0) target = $region33
    $region32: #{vae_forward.1} parent=1 // pred_region
      _
    $region33: #{vae_forward.1} parent=1 // pred_fallthru
      _
    // Predicated region
    $region34: #{vae_forward.1} parent=1 // pred_check
      _
    $region35: #{vae_forward.1} parent=1 // pred_check_branch
      %46 = sbr.rel (0) target = $region37
    $region36: #{vae_forward.1} parent=1 // pred_region
      %s48 = ssub.s32 8192, 8192
      %49 = vsyncadd [#allocation5], %s48
      %s50 = sshll.u32 [#allocation4], 4
      %s51 = int_to_ptr.vmem [resolvable:$true] %s50
      %56 = dma.hbm_to_vmem [thread:$0]  %s8, 8192, %s51, [#allocation5], 512, 512, 32
    $region37: #{vae_forward.1} parent=1 // pred_fallthru
      _
    // Predicated region
    $region38: #{vae_forward.1} parent=1 // pred_check
      _
    $region39: #{vae_forward.1} parent=1 // pred_check_branch
      %58 = sbr.rel (0) target = $region41
    $region40: #{vae_forward.1} parent=1 // pred_region
      _
    $region41: #{vae_forward.1} parent=1 // pred_fallthru
      _
    // Predicated region
    $region42: #{vae_forward.1} parent=1 // pred_check
      _
    $region43: #{vae_forward.1} parent=1 // pred_check_branch
      %60 = sbr.rel (0) target = $region45
    $region44: #{vae_forward.1} parent=1 // pred_region
      %61 = dma.done [#allocation3], 8192
    $region45: #{vae_forward.1} parent=1 // pred_fallthru
      _
    // Predicated region
    $region46: #{vae_forward.1} parent=1 // pred_check
      _
    $region47: #{vae_forward.1} parent=1 // pred_check_branch
      %63 = sbr.rel (0) target = $region49
    $region48: #{vae_forward.1} parent=1 // pred_region
      %64 = dma.done [#allocation5], 8192
    $region49: #{vae_forward.1} parent=1 // pred_fallthru
      _
    %v66 = vld [vmem:[%s0] sm:$0xff]
    %v67 = vld [vmem:[%s0 + $0x8] sm:$0xff]
    %v68 = vld [vmem:[%s0 + $0x10] sm:$0xff]
    %v69 = vld [vmem:[%s0 + $0x18] sm:$0xff]
    %v70 = vld [vmem:[%s0 + $0x20] sm:$0xff]
    %v71 = vld [vmem:[%s0 + $0x28] sm:$0xff]
    %v72 = vld [vmem:[%s0 + $0x30] sm:$0xff]
    %v73 = vld [vmem:[%s0 + $0x38] sm:$0xff]
    %v74 = vld [vmem:[#allocation2] sm:$0xf]
    %v75 = vld [vmem:[#allocation2 + $0x4] sm:$0xf]
    %v76 = vld [vmem:[#allocation2 + $0x8] sm:$0xf]
    %v77 = vld [vmem:[#allocation2 + $0xc] sm:$0xf]
    %v78 = vld [vmem:[#allocation2 + $0x10] sm:$0xf]
    %v79 = vld [vmem:[#allocation2 + $0x14] sm:$0xf]
    %v80 = vld [vmem:[#allocation2 + $0x18] sm:$0xf]
    %v81 = vld [vmem:[#allocation2 + $0x1c] sm:$0xf]
    %v82 = vld [vmem:[#allocation2 + $0x20] sm:$0xf]
    %v83 = vld [vmem:[#allocation2 + $0x24] sm:$0xf]
    %v84 = vld [vmem:[#allocation2 + $0x28] sm:$0xf]
    %v85 = vld [vmem:[#allocation2 + $0x2c] sm:$0xf]
    %v86 = vld [vmem:[#allocation2 + $0x30] sm:$0xf]
    %v87 = vld [vmem:[#allocation2 + $0x34] sm:$0xf]
    %v88 = vld [vmem:[#allocation2 + $0x38] sm:$0xf]
    %v89 = vld [vmem:[#allocation2 + $0x3c] sm:$0xf]
    %v90 = vld [vmem:[#allocation2 + $0x40] sm:$0xf]
    %v91 = vld [vmem:[#allocation2 + $0x44] sm:$0xf]
    %v92 = vld [vmem:[#allocation2 + $0x48] sm:$0xf]
    %v93 = vld [vmem:[#allocation2 + $0x4c] sm:$0xf]
    %v94 = vld [vmem:[#allocation2 + $0x50] sm:$0xf]
    %v95 = vld [vmem:[#allocation2 + $0x54] sm:$0xf]
    %v96 = vld [vmem:[#allocation2 + $0x58] sm:$0xf]
    %v97 = vld [vmem:[#allocation2 + $0x5c] sm:$0xf]
    %v98 = vld [vmem:[#allocation2 + $0x60] sm:$0xf]
    %v99 = vld [vmem:[#allocation2 + $0x64] sm:$0xf]
    %v100 = vld [vmem:[#allocation2 + $0x68] sm:$0xf]
    %v101 = vld [vmem:[#allocation2 + $0x6c] sm:$0xf]
    %v102 = vld [vmem:[#allocation2 + $0x70] sm:$0xf]
    %v103 = vld [vmem:[#allocation2 + $0x74] sm:$0xf]
    %v104 = vld [vmem:[#allocation2 + $0x78] sm:$0xf]
    %v105 = vld [vmem:[#allocation2 + $0x7c] sm:$0xf]
    %v106 = vld [vmem:[#allocation2 + $0x80] sm:$0xf]
    %v107 = vld [vmem:[#allocation2 + $0x84] sm:$0xf]
    %v108 = vld [vmem:[#allocation2 + $0x88] sm:$0xf]
    %v109 = vld [vmem:[#allocation2 + $0x8c] sm:$0xf]
    %v110 = vld [vmem:[#allocation2 + $0x90] sm:$0xf]
    %v111 = vld [vmem:[#allocation2 + $0x94] sm:$0xf]
    %v112 = vld [vmem:[#allocation2 + $0x98] sm:$0xf]
    %v113 = vld [vmem:[#allocation2 + $0x9c] sm:$0xf]
    %v114 = vld [vmem:[#allocation2 + $0xa0] sm:$0xf]
    %v115 = vld [vmem:[#allocation2 + $0xa4] sm:$0xf]
    %v116 = vld [vmem:[#allocation2 + $0xa8] sm:$0xf]
    %v117 = vld [vmem:[#allocation2 + $0xac] sm:$0xf]
    %v118 = vld [vmem:[#allocation2 + $0xb0] sm:$0xf]
    %v119 = vld [vmem:[#allocation2 + $0xb4] sm:$0xf]
    %v120 = vld [vmem:[#allocation2 + $0xb8] sm:$0xf]
    %v121 = vld [vmem:[#allocation2 + $0xbc] sm:$0xf]
    %v122 = vld [vmem:[#allocation2 + $0xc0] sm:$0xf]
    %v123 = vld [vmem:[#allocation2 + $0xc4] sm:$0xf]
    %v124 = vld [vmem:[#allocation2 + $0xc8] sm:$0xf]
    %v125 = vld [vmem:[#allocation2 + $0xcc] sm:$0xf]
    %v126 = vld [vmem:[#allocation2 + $0xd0] sm:$0xf]
    %v127 = vld [vmem:[#allocation2 + $0xd4] sm:$0xf]
    %v128 = vld [vmem:[#allocation2 + $0xd8] sm:$0xf]
    %v129 = vld [vmem:[#allocation2 + $0xdc] sm:$0xf]
    %v130 = vld [vmem:[#allocation2 + $0xe0] sm:$0xf]
    %v131 = vld [vmem:[#allocation2 + $0xe4] sm:$0xf]
    %v132 = vld [vmem:[#allocation2 + $0xe8] sm:$0xf]
    %v133 = vld [vmem:[#allocation2 + $0xec] sm:$0xf]
    %v134 = vld [vmem:[#allocation2 + $0xf0] sm:$0xf]
    %v135 = vld [vmem:[#allocation2 + $0xf4] sm:$0xf]
    %v136 = vld [vmem:[#allocation2 + $0xf8] sm:$0xf]
    %v137 = vld [vmem:[#allocation2 + $0xfc] sm:$0xf]
    %v138 = vld [vmem:[#allocation2 + $0x100] sm:$0xf]
    %v139 = vld [vmem:[#allocation2 + $0x104] sm:$0xf]
    %v140 = vld [vmem:[#allocation2 + $0x108] sm:$0xf]
    %v141 = vld [vmem:[#allocation2 + $0x10c] sm:$0xf]
    %v142 = vld [vmem:[#allocation2 + $0x110] sm:$0xf]
    %v143 = vld [vmem:[#allocation2 + $0x114] sm:$0xf]
    %v144 = vld [vmem:[#allocation2 + $0x118] sm:$0xf]
    %v145 = vld [vmem:[#allocation2 + $0x11c] sm:$0xf]
    %v146 = vld [vmem:[#allocation2 + $0x120] sm:$0xf]
    %v147 = vld [vmem:[#allocation2 + $0x124] sm:$0xf]
    %v148 = vld [vmem:[#allocation2 + $0x128] sm:$0xf]
    %v149 = vld [vmem:[#allocation2 + $0x12c] sm:$0xf]
    %v150 = vld [vmem:[#allocation2 + $0x130] sm:$0xf]
    %v151 = vld [vmem:[#allocation2 + $0x134] sm:$0xf]
    %v152 = vld [vmem:[#allocation2 + $0x138] sm:$0xf]
    %v153 = vld [vmem:[#allocation2 + $0x13c] sm:$0xf]
    %v154 = vld [vmem:[#allocation2 + $0x140] sm:$0xf]
    %v155 = vld [vmem:[#allocation2 + $0x144] sm:$0xf]
    %v156 = vld [vmem:[#allocation2 + $0x148] sm:$0xf]
    %v157 = vld [vmem:[#allocation2 + $0x14c] sm:$0xf]
    %v158 = vld [vmem:[#allocation2 + $0x150] sm:$0xf]
    %v159 = vld [vmem:[#allocation2 + $0x154] sm:$0xf]
    %v160 = vld [vmem:[#allocation2 + $0x158] sm:$0xf]
    %v161 = vld [vmem:[#allocation2 + $0x15c] sm:$0xf]
    %v162 = vld [vmem:[#allocation2 + $0x160] sm:$0xf]
    %v163 = vld [vmem:[#allocation2 + $0x164] sm:$0xf]
    %v164 = vld [vmem:[#allocation2 + $0x168] sm:$0xf]
    %v165 = vld [vmem:[#allocation2 + $0x16c] sm:$0xf]
    %v166 = vld [vmem:[#allocation2 + $0x170] sm:$0xf]
    %v167 = vld [vmem:[#allocation2 + $0x174] sm:$0xf]
    %v168 = vld [vmem:[#allocation2 + $0x178] sm:$0xf]
    %v169 = vld [vmem:[#allocation2 + $0x17c] sm:$0xf]
    %v170 = vld [vmem:[#allocation2 + $0x180] sm:$0xf]
    %v171 = vld [vmem:[#allocation2 + $0x184] sm:$0xf]
    %v172 = vld [vmem:[#allocation2 + $0x188] sm:$0xf]
    %v173 = vld [vmem:[#allocation2 + $0x18c] sm:$0xf]
    %v174 = vld [vmem:[#allocation2 + $0x190] sm:$0xf]
    %v175 = vld [vmem:[#allocation2 + $0x194] sm:$0xf]
    %v176 = vld [vmem:[#allocation2 + $0x198] sm:$0xf]
    %v177 = vld [vmem:[#allocation2 + $0x19c] sm:$0xf]
    %v178 = vld [vmem:[#allocation2 + $0x1a0] sm:$0xf]
    %v179 = vld [vmem:[#allocation2 + $0x1a4] sm:$0xf]
    %v180 = vld [vmem:[#allocation2 + $0x1a8] sm:$0xf]
    %v181 = vld [vmem:[#allocation2 + $0x1ac] sm:$0xf]
    %v182 = vld [vmem:[#allocation2 + $0x1b0] sm:$0xf]
    %v183 = vld [vmem:[#allocation2 + $0x1b4] sm:$0xf]
    %v184 = vld [vmem:[#allocation2 + $0x1b8] sm:$0xf]
    %v185 = vld [vmem:[#allocation2 + $0x1bc] sm:$0xf]
    %v186 = vld [vmem:[#allocation2 + $0x1c0] sm:$0xf]
    %v187 = vld [vmem:[#allocation2 + $0x1c4] sm:$0xf]
    %v188 = vld [vmem:[#allocation2 + $0x1c8] sm:$0xf]
    %v189 = vld [vmem:[#allocation2 + $0x1cc] sm:$0xf]
    %v190 = vld [vmem:[#allocation2 + $0x1d0] sm:$0xf]
    %v191 = vld [vmem:[#allocation2 + $0x1d4] sm:$0xf]
    %v192 = vld [vmem:[#allocation2 + $0x1d8] sm:$0xf]
    %v193 = vld [vmem:[#allocation2 + $0x1dc] sm:$0xf]
    %v194 = vld [vmem:[#allocation2 + $0x1e0] sm:$0xf]
    %v195 = vld [vmem:[#allocation2 + $0x1e4] sm:$0xf]
    %v196 = vld [vmem:[#allocation2 + $0x1e8] sm:$0xf]
    %v197 = vld [vmem:[#allocation2 + $0x1ec] sm:$0xf]
    %v198 = vld [vmem:[#allocation2 + $0x1f0] sm:$0xf]
    %v199 = vld [vmem:[#allocation2 + $0x1f4] sm:$0xf]
    %v200 = vld [vmem:[#allocation2 + $0x1f8] sm:$0xf]
    %v201 = vld [vmem:[#allocation2 + $0x1fc] sm:$0xf]
    %v202 = vld [vmem:[%s3] sm:$0x1]
    %v204 = vlaneseq
    %v205 = vshrl.u32 %v204, 7
    %v206 = vsub.s32 0, %v205
    %v207 = vrot.slane %v202, %v206
    %v217 = vunpack.c.l.b16 %v66
    %v218 = vunpack.c.h.b16 %v66
    %v219 = vunpack.c.l.b16 %v67
    %v220 = vunpack.c.h.b16 %v67
    %v221 = vunpack.c.l.b16 %v68
    %v222 = vunpack.c.h.b16 %v68
    %v223 = vunpack.c.l.b16 %v69
    %v224 = vunpack.c.h.b16 %v69
    %v225 = vunpack.c.l.b16 %v70
    %v226 = vunpack.c.h.b16 %v70
    %v227 = vunpack.c.l.b16 %v71
    %v228 = vunpack.c.h.b16 %v71
    %v229 = vunpack.c.l.b16 %v72
    %v230 = vunpack.c.h.b16 %v72
    %v231 = vunpack.c.l.b16 %v73
    %v232 = vunpack.c.h.b16 %v73
    %v233 = vpack.c.b16 %v225, %v217
    %v234 = vpack.c.b16 %v226, %v218
    %v235 = vpack.c.b16 %v227, %v219
    %v236 = vpack.c.b16 %v228, %v220
    %v237 = vpack.c.b16 %v229, %v221
    %v238 = vpack.c.b16 %v230, %v222
    %v239 = vpack.c.b16 %v231, %v223
    %v240 = vpack.c.b16 %v232, %v224
    %v377 = vunpack.c.l.b16 %v74
    %v378 = vunpack.c.l.b16 %v75
    %v379 = vunpack.c.l.b16 %v76
    %v380 = vunpack.c.l.b16 %v77
    %v381 = vunpack.c.l.b16 %v78
    %v382 = vunpack.c.l.b16 %v79
    %v383 = vunpack.c.l.b16 %v80
    %v384 = vunpack.c.l.b16 %v81
    %v385 = vunpack.c.l.b16 %v82
    %v386 = vunpack.c.l.b16 %v83
    %v387 = vunpack.c.l.b16 %v84
    %v388 = vunpack.c.l.b16 %v85
    %v389 = vunpack.c.l.b16 %v86
    %v390 = vunpack.c.l.b16 %v87
    %v391 = vunpack.c.l.b16 %v88
    %v392 = vunpack.c.l.b16 %v89
    %v393 = vunpack.c.l.b16 %v90
    %v394 = vunpack.c.l.b16 %v91
    %v395 = vunpack.c.l.b16 %v92
    %v396 = vunpack.c.l.b16 %v93
    %v397 = vunpack.c.l.b16 %v94
    %v398 = vunpack.c.l.b16 %v95
    %v399 = vunpack.c.l.b16 %v96
    %v400 = vunpack.c.l.b16 %v97
    %v401 = vunpack.c.l.b16 %v98
    %v402 = vunpack.c.l.b16 %v99
    %v403 = vunpack.c.l.b16 %v100
    %v404 = vunpack.c.l.b16 %v101
    %v405 = vunpack.c.l.b16 %v102
    %v406 = vunpack.c.l.b16 %v103
    %v407 = vunpack.c.l.b16 %v104
    %v408 = vunpack.c.l.b16 %v105
    %v409 = vunpack.c.l.b16 %v106
    %v410 = vunpack.c.l.b16 %v107
    %v411 = vunpack.c.l.b16 %v108
    %v412 = vunpack.c.l.b16 %v109
    %v413 = vunpack.c.l.b16 %v110
    %v414 = vunpack.c.l.b16 %v111
    %v415 = vunpack.c.l.b16 %v112
    %v416 = vunpack.c.l.b16 %v113
    %v417 = vunpack.c.l.b16 %v114
    %v418 = vunpack.c.l.b16 %v115
    %v419 = vunpack.c.l.b16 %v116
    %v420 = vunpack.c.l.b16 %v117
    %v421 = vunpack.c.l.b16 %v118
    %v422 = vunpack.c.l.b16 %v119
    %v423 = vunpack.c.l.b16 %v120
    %v424 = vunpack.c.l.b16 %v121
    %v425 = vunpack.c.l.b16 %v122
    %v426 = vunpack.c.l.b16 %v123
    %v427 = vunpack.c.l.b16 %v124
    %v428 = vunpack.c.l.b16 %v125
    %v429 = vunpack.c.l.b16 %v126
    %v430 = vunpack.c.l.b16 %v127
    %v431 = vunpack.c.l.b16 %v128
    %v432 = vunpack.c.l.b16 %v129
    %v433 = vunpack.c.l.b16 %v130
    %v434 = vunpack.c.l.b16 %v131
    %v435 = vunpack.c.l.b16 %v132
    %v436 = vunpack.c.l.b16 %v133
    %v437 = vunpack.c.l.b16 %v134
    %v438 = vunpack.c.l.b16 %v135
    %v439 = vunpack.c.l.b16 %v136
    %v440 = vunpack.c.l.b16 %v137
    %v441 = vunpack.c.l.b16 %v138
    %v442 = vunpack.c.l.b16 %v139
    %v443 = vunpack.c.l.b16 %v140
    %v444 = vunpack.c.l.b16 %v141
    %v445 = vunpack.c.l.b16 %v142
    %v446 = vunpack.c.l.b16 %v143
    %v447 = vunpack.c.l.b16 %v144
    %v448 = vunpack.c.l.b16 %v145
    %v449 = vunpack.c.l.b16 %v146
    %v450 = vunpack.c.l.b16 %v147
    %v451 = vunpack.c.l.b16 %v148
    %v452 = vunpack.c.l.b16 %v149
    %v453 = vunpack.c.l.b16 %v150
    %v454 = vunpack.c.l.b16 %v151
    %v455 = vunpack.c.l.b16 %v152
    %v456 = vunpack.c.l.b16 %v153
    %v457 = vunpack.c.l.b16 %v154
    %v458 = vunpack.c.l.b16 %v155
    %v459 = vunpack.c.l.b16 %v156
    %v460 = vunpack.c.l.b16 %v157
    %v461 = vunpack.c.l.b16 %v158
    %v462 = vunpack.c.l.b16 %v159
    %v463 = vunpack.c.l.b16 %v160
    %v464 = vunpack.c.l.b16 %v161
    %v465 = vunpack.c.l.b16 %v162
    %v466 = vunpack.c.l.b16 %v163
    %v467 = vunpack.c.l.b16 %v164
    %v468 = vunpack.c.l.b16 %v165
    %v469 = vunpack.c.l.b16 %v166
    %v470 = vunpack.c.l.b16 %v167
    %v471 = vunpack.c.l.b16 %v168
    %v472 = vunpack.c.l.b16 %v169
    %v473 = vunpack.c.l.b16 %v170
    %v474 = vunpack.c.l.b16 %v171
    %v475 = vunpack.c.l.b16 %v172
    %v476 = vunpack.c.l.b16 %v173
    %v477 = vunpack.c.l.b16 %v174
    %v478 = vunpack.c.l.b16 %v175
    %v479 = vunpack.c.l.b16 %v176
    %v480 = vunpack.c.l.b16 %v177
    %v481 = vunpack.c.l.b16 %v178
    %v482 = vunpack.c.l.b16 %v179
    %v483 = vunpack.c.l.b16 %v180
    %v484 = vunpack.c.l.b16 %v181
    %v485 = vunpack.c.l.b16 %v182
    %v486 = vunpack.c.l.b16 %v183
    %v487 = vunpack.c.l.b16 %v184
    %v488 = vunpack.c.l.b16 %v185
    %v489 = vunpack.c.l.b16 %v186
    %v490 = vunpack.c.l.b16 %v187
    %v491 = vunpack.c.l.b16 %v188
    %v492 = vunpack.c.l.b16 %v189
    %v493 = vunpack.c.l.b16 %v190
    %v494 = vunpack.c.l.b16 %v191
    %v495 = vunpack.c.l.b16 %v192
    %v496 = vunpack.c.l.b16 %v193
    %v497 = vunpack.c.l.b16 %v194
    %v498 = vunpack.c.l.b16 %v195
    %v499 = vunpack.c.l.b16 %v196
    %v500 = vunpack.c.l.b16 %v197
    %v501 = vunpack.c.l.b16 %v198
    %v502 = vunpack.c.l.b16 %v199
    %v503 = vunpack.c.l.b16 %v200
    %v504 = vunpack.c.l.b16 %v201
    %v505 = vpack.c.b16 %v378, %v377
    %v506 = vpack.c.b16 %v380, %v379
    %v507 = vpack.c.b16 %v382, %v381
    %v508 = vpack.c.b16 %v384, %v383
    %v509 = vpack.c.b16 %v386, %v385
    %v510 = vpack.c.b16 %v388, %v387
    %v511 = vpack.c.b16 %v390, %v389
    %v512 = vpack.c.b16 %v392, %v391
    %v513 = vpack.c.b16 %v394, %v393
    %v514 = vpack.c.b16 %v396, %v395
    %v515 = vpack.c.b16 %v398, %v397
    %v516 = vpack.c.b16 %v400, %v399
    %v517 = vpack.c.b16 %v402, %v401
    %v518 = vpack.c.b16 %v404, %v403
    %v519 = vpack.c.b16 %v406, %v405
    %v520 = vpack.c.b16 %v408, %v407
    %v521 = vpack.c.b16 %v410, %v409
    %v522 = vpack.c.b16 %v412, %v411
    %v523 = vpack.c.b16 %v414, %v413
    %v524 = vpack.c.b16 %v416, %v415
    %v525 = vpack.c.b16 %v418, %v417
    %v526 = vpack.c.b16 %v420, %v419
    %v527 = vpack.c.b16 %v422, %v421
    %v528 = vpack.c.b16 %v424, %v423
    %v529 = vpack.c.b16 %v426, %v425
    %v530 = vpack.c.b16 %v428, %v427
    %v531 = vpack.c.b16 %v430, %v429
    %v532 = vpack.c.b16 %v432, %v431
    %v533 = vpack.c.b16 %v434, %v433
    %v534 = vpack.c.b16 %v436, %v435
    %v535 = vpack.c.b16 %v438, %v437
    %v536 = vpack.c.b16 %v440, %v439
    %v537 = vpack.c.b16 %v442, %v441
    %v538 = vpack.c.b16 %v444, %v443
    %v539 = vpack.c.b16 %v446, %v445
    %v540 = vpack.c.b16 %v448, %v447
    %v541 = vpack.c.b16 %v450, %v449
    %v542 = vpack.c.b16 %v452, %v451
    %v543 = vpack.c.b16 %v454, %v453
    %v544 = vpack.c.b16 %v456, %v455
    %v545 = vpack.c.b16 %v458, %v457
    %v546 = vpack.c.b16 %v460, %v459
    %v547 = vpack.c.b16 %v462, %v461
    %v548 = vpack.c.b16 %v464, %v463
    %v549 = vpack.c.b16 %v466, %v465
    %v550 = vpack.c.b16 %v468, %v467
    %v551 = vpack.c.b16 %v470, %v469
    %v552 = vpack.c.b16 %v472, %v471
    %v553 = vpack.c.b16 %v474, %v473
    %v554 = vpack.c.b16 %v476, %v475
    %v555 = vpack.c.b16 %v478, %v477
    %v556 = vpack.c.b16 %v480, %v479
    %v557 = vpack.c.b16 %v482, %v481
    %v558 = vpack.c.b16 %v484, %v483
    %v559 = vpack.c.b16 %v486, %v485
    %v560 = vpack.c.b16 %v488, %v487
    %v561 = vpack.c.b16 %v490, %v489
    %v562 = vpack.c.b16 %v492, %v491
    %v563 = vpack.c.b16 %v494, %v493
    %v564 = vpack.c.b16 %v496, %v495
    %v565 = vpack.c.b16 %v498, %v497
    %v566 = vpack.c.b16 %v500, %v499
    %v567 = vpack.c.b16 %v502, %v501
    %v568 = vpack.c.b16 %v504, %v503
    %633 = vmatprep.subr.bf16.mxu0 0
    %634 = vmatpush1.bf16.msra.mxu0 %v512
    %635 = vmatprep.subr.bf16.mxu0 0
    %636 = vmatpush1.bf16.msra.mxu0 %v511
    %637 = vmatprep.subr.bf16.mxu0 0
    %638 = vmatpush1.bf16.msra.mxu0 %v510
    %639 = vmatprep.subr.bf16.mxu0 0
    %640 = vmatpush1.bf16.msra.mxu0 %v509
    %641 = vmatprep.subr.bf16.mxu0 0
    %642 = vmatpush1.bf16.msra.mxu0 %v508
    %643 = vmatprep.subr.bf16.mxu0 0
    %644 = vmatpush1.bf16.msra.mxu0 %v507
    %645 = vmatprep.subr.bf16.mxu0 0
    %646 = vmatpush1.bf16.msra.mxu0 %v506
    %647 = vmatprep.subr.bf16.mxu0 0
    %648 = vmatpush1.bf16.msra.mxu0 %v505
    %649 = vmatprep.subr.bf16.mxu0 0
    %650 = vmatpush2.bf16.msra.mxu0 %v520
    %651 = vmatprep.subr.bf16.mxu0 0
    %652 = vmatpush2.bf16.msra.mxu0 %v519
    %653 = vmatprep.subr.bf16.mxu0 0
    %654 = vmatpush2.bf16.msra.mxu0 %v518
    %655 = vmatprep.subr.bf16.mxu0 0
    %656 = vmatpush2.bf16.msra.mxu0 %v517
    %657 = vmatprep.subr.bf16.mxu0 0
    %658 = vmatpush2.bf16.msra.mxu0 %v516
    %659 = vmatprep.subr.bf16.mxu0 0
    %660 = vmatpush2.bf16.msra.mxu0 %v515
    %661 = vmatprep.subr.bf16.mxu0 0
    %662 = vmatpush2.bf16.msra.mxu0 %v514
    %663 = vmatprep.subr.bf16.mxu0 0
    %664 = vmatpush2.bf16.msra.mxu0 %v513
    %665 = vmatprep.mubr.bf16.mxu0 %v234
    %666 = vmatmul.mubr.bf16.gmra.mxu0 %v233
    %v667 = vpop.f32.mrf.mxu0
    %v668 = vadd.f32 %v207, %v667
    %v669 = vpop.f32.mrf.mxu0
    %v670 = vpop.f32.mrf.mxu0
    %v671 = vadd.f32 %v207, %v670
    %v672 = vpop.f32.mrf.mxu0
    %673 = vdwg.mxu0
    %674 = vmatprep.subr.bf16.mxu0 0
    %675 = vmatpush1.bf16.msra.mxu0 %v528
    %676 = vmatprep.subr.bf16.mxu0 0
    %677 = vmatpush1.bf16.msra.mxu0 %v527
    %678 = vmatprep.subr.bf16.mxu0 0
    %679 = vmatpush1.bf16.msra.mxu0 %v526
    %680 = vmatprep.subr.bf16.mxu0 0
    %681 = vmatpush1.bf16.msra.mxu0 %v525
    %682 = vmatprep.subr.bf16.mxu0 0
    %683 = vmatpush1.bf16.msra.mxu0 %v524
    %684 = vmatprep.subr.bf16.mxu0 0
    %685 = vmatpush1.bf16.msra.mxu0 %v523
    %686 = vmatprep.subr.bf16.mxu0 0
    %687 = vmatpush1.bf16.msra.mxu0 %v522
    %688 = vmatprep.subr.bf16.mxu0 0
    %689 = vmatpush1.bf16.msra.mxu0 %v521
    %690 = vmatprep.subr.bf16.mxu0 0
    %691 = vmatpush2.bf16.msra.mxu0 %v536
    %692 = vmatprep.subr.bf16.mxu0 0
    %693 = vmatpush2.bf16.msra.mxu0 %v535
    %694 = vmatprep.subr.bf16.mxu0 0
    %695 = vmatpush2.bf16.msra.mxu0 %v534
    %696 = vmatprep.subr.bf16.mxu0 0
    %697 = vmatpush2.bf16.msra.mxu0 %v533
    %698 = vmatprep.subr.bf16.mxu0 0
    %699 = vmatpush2.bf16.msra.mxu0 %v532
    %700 = vmatprep.subr.bf16.mxu0 0
    %701 = vmatpush2.bf16.msra.mxu0 %v531
    %702 = vmatprep.subr.bf16.mxu0 0
    %703 = vmatpush2.bf16.msra.mxu0 %v530
    %704 = vmatprep.subr.bf16.mxu0 0
    %705 = vmatpush2.bf16.msra.mxu0 %v529
    %706 = vmatprep.mubr.bf16.mxu0 %v236
    %707 = vmatmul.mubr.bf16.gmra.mxu0 %v235
    %v708 = vpop.f32.mrf.mxu0
    %v709 = vadd.f32 %v668, %v708
    %v710 = vpop.f32.mrf.mxu0
    %v711 = vpop.f32.mrf.mxu0
    %v712 = vadd.f32 %v671, %v711
    %v713 = vpop.f32.mrf.mxu0
    %714 = vdwg.mxu0
    %715 = vmatprep.subr.bf16.mxu0 0
    %716 = vmatpush1.bf16.msra.mxu0 %v544
    %717 = vmatprep.subr.bf16.mxu0 0
    %718 = vmatpush1.bf16.msra.mxu0 %v543
    %719 = vmatprep.subr.bf16.mxu0 0
    %720 = vmatpush1.bf16.msra.mxu0 %v542
    %721 = vmatprep.subr.bf16.mxu0 0
    %722 = vmatpush1.bf16.msra.mxu0 %v541
    %723 = vmatprep.subr.bf16.mxu0 0
    %724 = vmatpush1.bf16.msra.mxu0 %v540
    %725 = vmatprep.subr.bf16.mxu0 0
    %726 = vmatpush1.bf16.msra.mxu0 %v539
    %727 = vmatprep.subr.bf16.mxu0 0
    %728 = vmatpush1.bf16.msra.mxu0 %v538
    %729 = vmatprep.subr.bf16.mxu0 0
    %730 = vmatpush1.bf16.msra.mxu0 %v537
    %731 = vmatprep.subr.bf16.mxu0 0
    %732 = vmatpush2.bf16.msra.mxu0 %v552
    %733 = vmatprep.subr.bf16.mxu0 0
    %734 = vmatpush2.bf16.msra.mxu0 %v551
    %735 = vmatprep.subr.bf16.mxu0 0
    %736 = vmatpush2.bf16.msra.mxu0 %v550
    %737 = vmatprep.subr.bf16.mxu0 0
    %738 = vmatpush2.bf16.msra.mxu0 %v549
    %739 = vmatprep.subr.bf16.mxu0 0
    %740 = vmatpush2.bf16.msra.mxu0 %v548
    %741 = vmatprep.subr.bf16.mxu0 0
    %742 = vmatpush2.bf16.msra.mxu0 %v547
    %743 = vmatprep.subr.bf16.mxu0 0
    %744 = vmatpush2.bf16.msra.mxu0 %v546
    %745 = vmatprep.subr.bf16.mxu0 0
    %746 = vmatpush2.bf16.msra.mxu0 %v545
    %747 = vmatprep.mubr.bf16.mxu0 %v238
    %748 = vmatmul.mubr.bf16.gmra.mxu0 %v237
    %v749 = vpop.f32.mrf.mxu0
    %v750 = vadd.f32 %v709, %v749
    %v751 = vpop.f32.mrf.mxu0
    %v752 = vpop.f32.mrf.mxu0
    %v753 = vadd.f32 %v712, %v752
    %v754 = vpop.f32.mrf.mxu0
    %755 = vdwg.mxu0
    %756 = vmatprep.subr.bf16.mxu0 0
    %757 = vmatpush1.bf16.msra.mxu0 %v560
    %758 = vmatprep.subr.bf16.mxu0 0
    %759 = vmatpush1.bf16.msra.mxu0 %v559
    %760 = vmatprep.subr.bf16.mxu0 0
    %761 = vmatpush1.bf16.msra.mxu0 %v558
    %762 = vmatprep.subr.bf16.mxu0 0
    %763 = vmatpush1.bf16.msra.mxu0 %v557
    %764 = vmatprep.subr.bf16.mxu0 0
    %765 = vmatpush1.bf16.msra.mxu0 %v556
    %766 = vmatprep.subr.bf16.mxu0 0
    %767 = vmatpush1.bf16.msra.mxu0 %v555
    %768 = vmatprep.subr.bf16.mxu0 0
    %769 = vmatpush1.bf16.msra.mxu0 %v554
    %770 = vmatprep.subr.bf16.mxu0 0
    %771 = vmatpush1.bf16.msra.mxu0 %v553
    %772 = vmatprep.subr.bf16.mxu0 0
    %773 = vmatpush2.bf16.msra.mxu0 %v568
    %774 = vmatprep.subr.bf16.mxu0 0
    %775 = vmatpush2.bf16.msra.mxu0 %v567
    %776 = vmatprep.subr.bf16.mxu0 0
    %777 = vmatpush2.bf16.msra.mxu0 %v566
    %778 = vmatprep.subr.bf16.mxu0 0
    %779 = vmatpush2.bf16.msra.mxu0 %v565
    %780 = vmatprep.subr.bf16.mxu0 0
    %781 = vmatpush2.bf16.msra.mxu0 %v564
    %782 = vmatprep.subr.bf16.mxu0 0
    %783 = vmatpush2.bf16.msra.mxu0 %v563
    %784 = vmatprep.subr.bf16.mxu0 0
    %785 = vmatpush2.bf16.msra.mxu0 %v562
    %786 = vmatprep.subr.bf16.mxu0 0
    %787 = vmatpush2.bf16.msra.mxu0 %v561
    %788 = vmatprep.mubr.bf16.mxu0 %v240
    %789 = vmatmul.mubr.bf16.gmra.mxu0 %v239
    %v790 = vpop.f32.mrf.mxu0
    %v791 = vadd.f32 %v750, %v790
    %v792 = vpop.f32.mrf.mxu0
    %v793 = vpop.f32.mrf.mxu0
    %v794 = vadd.f32 %v753, %v793
    %v795 = vpop.f32.mrf.mxu0
    %796 = vdwg.mxu0
    %v797 = vmax.f32 %v791, 0.0
    %v798 = vmax.f32 %v794, 0.0
    %v799 = vpack.c.bf16 %v798, %v797
    %v800 = vld [vmem:[%s4] sm:$0xff]
    %v801 = vld [vmem:[%s4 + $0x8] sm:$0xff]
    %v802 = vld [vmem:[%s4 + $0x10] sm:$0xff]
    %v803 = vld [vmem:[%s4 + $0x18] sm:$0xff]
    %v804 = vld [vmem:[%s4 + $0x20] sm:$0xff]
    %v805 = vld [vmem:[%s4 + $0x28] sm:$0xff]
    %v806 = vld [vmem:[%s4 + $0x30] sm:$0xff]
    %v807 = vld [vmem:[%s4 + $0x38] sm:$0xff]
    %v808 = vld [vmem:[%s4 + $0x40] sm:$0xff]
    %v809 = vld [vmem:[%s4 + $0x48] sm:$0xff]
    %v810 = vld [vmem:[%s4 + $0x50] sm:$0xff]
    %v811 = vld [vmem:[%s4 + $0x58] sm:$0xff]
    %v812 = vld [vmem:[%s4 + $0x60] sm:$0xff]
    %v813 = vld [vmem:[%s4 + $0x68] sm:$0xff]
    %v814 = vld [vmem:[%s4 + $0x70] sm:$0xff]
    %v815 = vld [vmem:[%s4 + $0x78] sm:$0xff]
    %v816 = vld [vmem:[%s5] sm:$0x3]
    %v818 = vlaneseq
    %v819 = vshrl.u32 %v818, 7
    %v820 = vsub.s32 0, %v819
    %v821 = vrot.slane %v816, %v820
    %v822 = vlaneseq
    %v823 = vshrl.u32 %v822, 7
    %v824 = vsub.s32 1, %v823
    %v825 = vrot.slane %v816, %v824
    %v844 = vunpack.c.l.b16 %v800
    %v845 = vunpack.c.h.b16 %v800
    %v846 = vunpack.c.l.b16 %v801
    %v847 = vunpack.c.h.b16 %v801
    %v848 = vunpack.c.l.b16 %v802
    %v849 = vunpack.c.h.b16 %v802
    %v850 = vunpack.c.l.b16 %v803
    %v851 = vunpack.c.h.b16 %v803
    %v852 = vunpack.c.l.b16 %v804
    %v853 = vunpack.c.h.b16 %v804
    %v854 = vunpack.c.l.b16 %v805
    %v855 = vunpack.c.h.b16 %v805
    %v856 = vunpack.c.l.b16 %v806
    %v857 = vunpack.c.h.b16 %v806
    %v858 = vunpack.c.l.b16 %v807
    %v859 = vunpack.c.h.b16 %v807
    %v860 = vunpack.c.l.b16 %v808
    %v861 = vunpack.c.h.b16 %v808
    %v862 = vunpack.c.l.b16 %v809
    %v863 = vunpack.c.h.b16 %v809
    %v864 = vunpack.c.l.b16 %v810
    %v865 = vunpack.c.h.b16 %v810
    %v866 = vunpack.c.l.b16 %v811
    %v867 = vunpack.c.h.b16 %v811
    %v868 = vunpack.c.l.b16 %v812
    %v869 = vunpack.c.h.b16 %v812
    %v870 = vunpack.c.l.b16 %v813
    %v871 = vunpack.c.h.b16 %v813
    %v872 = vunpack.c.l.b16 %v814
    %v873 = vunpack.c.h.b16 %v814
    %v874 = vunpack.c.l.b16 %v815
    %v875 = vunpack.c.h.b16 %v815
    %v876 = vpack.c.b16 %v846, %v844
    %v877 = vpack.c.b16 %v847, %v845
    %v878 = vpack.c.b16 %v850, %v848
    %v879 = vpack.c.b16 %v851, %v849
    %v880 = vpack.c.b16 %v854, %v852
    %v881 = vpack.c.b16 %v855, %v853
    %v882 = vpack.c.b16 %v858, %v856
    %v883 = vpack.c.b16 %v859, %v857
    %v884 = vpack.c.b16 %v862, %v860
    %v885 = vpack.c.b16 %v863, %v861
    %v886 = vpack.c.b16 %v866, %v864
    %v887 = vpack.c.b16 %v867, %v865
    %v888 = vpack.c.b16 %v870, %v868
    %v889 = vpack.c.b16 %v871, %v869
    %v890 = vpack.c.b16 %v874, %v872
    %v891 = vpack.c.b16 %v875, %v873
    %908 = vmatprep.subr.bf16.mxu0 %v891
    %909 = vmatpush1.bf16.msra.mxu0 %v890
    %910 = vmatprep.subr.bf16.mxu0 %v889
    %911 = vmatpush1.bf16.msra.mxu0 %v888
    %912 = vmatprep.subr.bf16.mxu0 %v887
    %913 = vmatpush1.bf16.msra.mxu0 %v886
    %914 = vmatprep.subr.bf16.mxu0 %v885
    %915 = vmatpush1.bf16.msra.mxu0 %v884
    %916 = vmatprep.subr.bf16.mxu0 %v883
    %917 = vmatpush1.bf16.msra.mxu0 %v882
    %918 = vmatprep.subr.bf16.mxu0 %v881
    %919 = vmatpush1.bf16.msra.mxu0 %v880
    %920 = vmatprep.subr.bf16.mxu0 %v879
    %921 = vmatpush1.bf16.msra.mxu0 %v878
    %922 = vmatprep.subr.bf16.mxu0 %v877
    %923 = vmatpush1.bf16.msra.mxu0 %v876
    %924 = vmatprep.subr.bf16.mxu0 0
    %925 = vmatpush2.bf16.msra.mxu0 0
    %926 = vmatprep.subr.bf16.mxu0 0
    %927 = vmatpush2.bf16.msra.mxu0 0
    %928 = vmatprep.subr.bf16.mxu0 0
    %929 = vmatpush2.bf16.msra.mxu0 0
    %930 = vmatprep.subr.bf16.mxu0 0
    %931 = vmatpush2.bf16.msra.mxu0 0
    %932 = vmatprep.subr.bf16.mxu0 0
    %933 = vmatpush2.bf16.msra.mxu0 0
    %934 = vmatprep.subr.bf16.mxu0 0
    %935 = vmatpush2.bf16.msra.mxu0 0
    %936 = vmatprep.subr.bf16.mxu0 0
    %937 = vmatpush2.bf16.msra.mxu0 0
    %938 = vmatprep.subr.bf16.mxu0 0
    %939 = vmatpush2.bf16.msra.mxu0 0
    %940 = vmatprep.mubr.bf16.mxu0 0
    %941 = vmatmul.mubr.bf16.gmra.mxu0 %v799
    %v942 = vpop.f32.mrf.mxu0
    %v943 = vadd.f32 %v821, %v942
    %v944 = vpop.f32.mrf.mxu0
    %v945 = vadd.f32 %v825, %v944
    %v946 = vpop.f32.mrf.mxu0
    %v947 = vadd.f32 %v821, %v946
    %v948 = vpop.f32.mrf.mxu0
    %v949 = vadd.f32 %v825, %v948
    %950 = vdwg.mxu0
    %v951 = vmul.f32 %v945, 0.5
    %v952 = vmul.f32 %v949, 0.5
    %v953 = vmul.f32 %v951, 1.442695
    %v954 = vpow.pop %v953
    %v955 = vmul.f32 %v952, 1.442695
    %v956 = vpow.pop %v955
    %v957 = vld [vmem:[%s1] sm:$0xff]
    %v958 = vld [vmem:[%s1 + $0x8] sm:$0xff]
    %v959 = vmul.f32 %v954, %v957
    %v960 = vmul.f32 %v956, %v958
    %v961 = vadd.f32 %v943, %v959
    %v962 = vadd.f32 %v947, %v960
    %v963 = vpack.c.bf16 %v962, %v961
    %v964 = vld [vmem:[%s6] sm:$0xf]
    %v965 = vld [vmem:[%s6 + $0x4] sm:$0xf]
    %v966 = vld [vmem:[%s6 + $0x8] sm:$0xf]
    %v967 = vld [vmem:[%s6 + $0xc] sm:$0xf]
    %v968 = vld [vmem:[%s6 + $0x10] sm:$0xf]
    %v969 = vld [vmem:[%s6 + $0x14] sm:$0xf]
    %v970 = vld [vmem:[%s6 + $0x18] sm:$0xf]
    %v971 = vld [vmem:[%s6 + $0x1c] sm:$0xf]
    %v972 = vld [vmem:[%s6 + $0x20] sm:$0xf]
    %v973 = vld [vmem:[%s6 + $0x24] sm:$0xf]
    %v974 = vld [vmem:[%s6 + $0x28] sm:$0xf]
    %v975 = vld [vmem:[%s6 + $0x2c] sm:$0xf]
    %v976 = vld [vmem:[%s6 + $0x30] sm:$0xf]
    %v977 = vld [vmem:[%s6 + $0x34] sm:$0xf]
    %v978 = vld [vmem:[%s6 + $0x38] sm:$0xf]
    %v979 = vld [vmem:[%s6 + $0x3c] sm:$0xf]
    %v980 = vld [vmem:[%s7] sm:$0x1]
    %v982 = vlaneseq
    %v983 = vshrl.u32 %v982, 7
    %v984 = vsub.s32 0, %v983
    %v985 = vrot.slane %v980, %v984
    %v1003 = vunpack.c.l.b16 %v964
    %v1004 = vunpack.c.l.b16 %v965
    %v1005 = vunpack.c.l.b16 %v966
    %v1006 = vunpack.c.l.b16 %v967
    %v1007 = vunpack.c.l.b16 %v968
    %v1008 = vunpack.c.l.b16 %v969
    %v1009 = vunpack.c.l.b16 %v970
    %v1010 = vunpack.c.l.b16 %v971
    %v1011 = vunpack.c.l.b16 %v972
    %v1012 = vunpack.c.l.b16 %v973
    %v1013 = vunpack.c.l.b16 %v974
    %v1014 = vunpack.c.l.b16 %v975
    %v1015 = vunpack.c.l.b16 %v976
    %v1016 = vunpack.c.l.b16 %v977
    %v1017 = vunpack.c.l.b16 %v978
    %v1018 = vunpack.c.l.b16 %v979
    %v1019 = vpack.c.b16 %v1004, %v1003
    %v1020 = vpack.c.b16 %v1006, %v1005
    %v1021 = vpack.c.b16 %v1008, %v1007
    %v1022 = vpack.c.b16 %v1010, %v1009
    %v1023 = vpack.c.b16 %v1012, %v1011
    %v1024 = vpack.c.b16 %v1014, %v1013
    %v1025 = vpack.c.b16 %v1016, %v1015
    %v1026 = vpack.c.b16 %v1018, %v1017
    %1035 = vmatprep.subr.bf16.mxu0 0
    %1036 = vmatpush1.bf16.msra.mxu0 %v1026
    %1037 = vmatprep.subr.bf16.mxu0 0
    %1038 = vmatpush1.bf16.msra.mxu0 %v1025
    %1039 = vmatprep.subr.bf16.mxu0 0
    %1040 = vmatpush1.bf16.msra.mxu0 %v1024
    %1041 = vmatprep.subr.bf16.mxu0 0
    %1042 = vmatpush1.bf16.msra.mxu0 %v1023
    %1043 = vmatprep.subr.bf16.mxu0 0
    %1044 = vmatpush1.bf16.msra.mxu0 %v1022
    %1045 = vmatprep.subr.bf16.mxu0 0
    %1046 = vmatpush1.bf16.msra.mxu0 %v1021
    %1047 = vmatprep.subr.bf16.mxu0 0
    %1048 = vmatpush1.bf16.msra.mxu0 %v1020
    %1049 = vmatprep.subr.bf16.mxu0 0
    %1050 = vmatpush1.bf16.msra.mxu0 %v1019
    %1051 = vmatprep.subr.bf16.mxu0 0
    %1052 = vmatpush2.bf16.msra.mxu0 0
    %1053 = vmatprep.subr.bf16.mxu0 0
    %1054 = vmatpush2.bf16.msra.mxu0 0
    %1055 = vmatprep.subr.bf16.mxu0 0
    %1056 = vmatpush2.bf16.msra.mxu0 0
    %1057 = vmatprep.subr.bf16.mxu0 0
    %1058 = vmatpush2.bf16.msra.mxu0 0
    %1059 = vmatprep.subr.bf16.mxu0 0
    %1060 = vmatpush2.bf16.msra.mxu0 0
    %1061 = vmatprep.subr.bf16.mxu0 0
    %1062 = vmatpush2.bf16.msra.mxu0 0
    %1063 = vmatprep.subr.bf16.mxu0 0
    %1064 = vmatpush2.bf16.msra.mxu0 0
    %1065 = vmatprep.subr.bf16.mxu0 0
    %1066 = vmatpush2.bf16.msra.mxu0 0
    %1067 = vmatprep.mubr.bf16.mxu0 0
    %1068 = vmatmul.mubr.bf16.gmra.mxu0 %v963
    %v1069 = vpop.f32.mrf.mxu0
    %v1070 = vadd.f32 %v985, %v1069
    %v1071 = vpop.f32.mrf.mxu0
    %v1072 = vpop.f32.mrf.mxu0
    %v1073 = vadd.f32 %v985, %v1072
    %v1074 = vpop.f32.mrf.mxu0
    %1075 = vdwg.mxu0
    %v1076 = vmax.f32 %v1070, 0.0
    %v1077 = vmax.f32 %v1073, 0.0
    %v1078 = vpack.c.bf16 %v1077, %v1076
    %v1079 = vld [vmem:[#allocation4] sm:$0xff]
    %v1080 = vld [vmem:[#allocation4 + $0x8] sm:$0xff]
    %v1081 = vld [vmem:[#allocation4 + $0x10] sm:$0xff]
    %v1082 = vld [vmem:[#allocation4 + $0x18] sm:$0xff]
    %v1083 = vld [vmem:[#allocation4 + $0x20] sm:$0xff]
    %v1084 = vld [vmem:[#allocation4 + $0x28] sm:$0xff]
    %v1085 = vld [vmem:[#allocation4 + $0x30] sm:$0xff]
    %v1086 = vld [vmem:[#allocation4 + $0x38] sm:$0xff]
    %v1087 = vld [vmem:[#allocation4 + $0x40] sm:$0xff]
    %v1088 = vld [vmem:[#allocation4 + $0x48] sm:$0xff]
    %v1089 = vld [vmem:[#allocation4 + $0x50] sm:$0xff]
    %v1090 = vld [vmem:[#allocation4 + $0x58] sm:$0xff]
    %v1091 = vld [vmem:[#allocation4 + $0x60] sm:$0xff]
    %v1092 = vld [vmem:[#allocation4 + $0x68] sm:$0xff]
    %v1093 = vld [vmem:[#allocation4 + $0x70] sm:$0xff]
    %v1094 = vld [vmem:[#allocation4 + $0x78] sm:$0xff]
    %v1095 = vld [vmem:[#allocation4 + $0x80] sm:$0xff]
    %v1096 = vld [vmem:[#allocation4 + $0x88] sm:$0xff]
    %v1097 = vld [vmem:[#allocation4 + $0x90] sm:$0xff]
    %v1098 = vld [vmem:[#allocation4 + $0x98] sm:$0xff]
    %v1099 = vld [vmem:[#allocation4 + $0xa0] sm:$0xff]
    %v1100 = vld [vmem:[#allocation4 + $0xa8] sm:$0xff]
    %v1101 = vld [vmem:[#allocation4 + $0xb0] sm:$0xff]
    %v1102 = vld [vmem:[#allocation4 + $0xb8] sm:$0xff]
    %v1103 = vld [vmem:[#allocation4 + $0xc0] sm:$0xff]
    %v1104 = vld [vmem:[#allocation4 + $0xc8] sm:$0xff]
    %v1105 = vld [vmem:[#allocation4 + $0xd0] sm:$0xff]
    %v1106 = vld [vmem:[#allocation4 + $0xd8] sm:$0xff]
    %v1107 = vld [vmem:[#allocation4 + $0xe0] sm:$0xff]
    %v1108 = vld [vmem:[#allocation4 + $0xe8] sm:$0xff]
    %v1109 = vld [vmem:[#allocation4 + $0xf0] sm:$0xff]
    %v1110 = vld [vmem:[#allocation4 + $0xf8] sm:$0xff]
    %v1111 = vld [vmem:[#allocation4 + $0x100] sm:$0xff]
    %v1112 = vld [vmem:[#allocation4 + $0x108] sm:$0xff]
    %v1113 = vld [vmem:[#allocation4 + $0x110] sm:$0xff]
    %v1114 = vld [vmem:[#allocation4 + $0x118] sm:$0xff]
    %v1115 = vld [vmem:[#allocation4 + $0x120] sm:$0xff]
    %v1116 = vld [vmem:[#allocation4 + $0x128] sm:$0xff]
    %v1117 = vld [vmem:[#allocation4 + $0x130] sm:$0xff]
    %v1118 = vld [vmem:[#allocation4 + $0x138] sm:$0xff]
    %v1119 = vld [vmem:[#allocation4 + $0x140] sm:$0xff]
    %v1120 = vld [vmem:[#allocation4 + $0x148] sm:$0xff]
    %v1121 = vld [vmem:[#allocation4 + $0x150] sm:$0xff]
    %v1122 = vld [vmem:[#allocation4 + $0x158] sm:$0xff]
    %v1123 = vld [vmem:[#allocation4 + $0x160] sm:$0xff]
    %v1124 = vld [vmem:[#allocation4 + $0x168] sm:$0xff]
    %v1125 = vld [vmem:[#allocation4 + $0x170] sm:$0xff]
    %v1126 = vld [vmem:[#allocation4 + $0x178] sm:$0xff]
    %v1127 = vld [vmem:[#allocation4 + $0x180] sm:$0xff]
    %v1128 = vld [vmem:[#allocation4 + $0x188] sm:$0xff]
    %v1129 = vld [vmem:[#allocation4 + $0x190] sm:$0xff]
    %v1130 = vld [vmem:[#allocation4 + $0x198] sm:$0xff]
    %v1131 = vld [vmem:[#allocation4 + $0x1a0] sm:$0xff]
    %v1132 = vld [vmem:[#allocation4 + $0x1a8] sm:$0xff]
    %v1133 = vld [vmem:[#allocation4 + $0x1b0] sm:$0xff]
    %v1134 = vld [vmem:[#allocation4 + $0x1b8] sm:$0xff]
    %v1135 = vld [vmem:[#allocation4 + $0x1c0] sm:$0xff]
    %v1136 = vld [vmem:[#allocation4 + $0x1c8] sm:$0xff]
    %v1137 = vld [vmem:[#allocation4 + $0x1d0] sm:$0xff]
    %v1138 = vld [vmem:[#allocation4 + $0x1d8] sm:$0xff]
    %v1139 = vld [vmem:[#allocation4 + $0x1e0] sm:$0xff]
    %v1140 = vld [vmem:[#allocation4 + $0x1e8] sm:$0xff]
    %v1141 = vld [vmem:[#allocation4 + $0x1f0] sm:$0xff]
    %v1142 = vld [vmem:[#allocation4 + $0x1f8] sm:$0xff]
    %v1143 = vld [vmem:[%s9] sm:$0xff]
    %v1145 = vlaneseq
    %v1146 = vshrl.u32 %v1145, 7
    %v1147 = vsub.s32 0, %v1146
    %v1148 = vrot.slane %v1143, %v1147
    %v1149 = vlaneseq
    %v1150 = vshrl.u32 %v1149, 7
    %v1151 = vsub.s32 1, %v1150
    %v1152 = vrot.slane %v1143, %v1151
    %v1153 = vlaneseq
    %v1154 = vshrl.u32 %v1153, 7
    %v1155 = vsub.s32 2, %v1154
    %v1156 = vrot.slane %v1143, %v1155
    %v1157 = vlaneseq
    %v1158 = vshrl.u32 %v1157, 7
    %v1159 = vsub.s32 3, %v1158
    %v1160 = vrot.slane %v1143, %v1159
    %v1161 = vlaneseq
    %v1162 = vshrl.u32 %v1161, 7
    %v1163 = vsub.s32 4, %v1162
    %v1164 = vrot.slane %v1143, %v1163
    %v1165 = vlaneseq
    %v1166 = vshrl.u32 %v1165, 7
    %v1167 = vsub.s32 5, %v1166
    %v1168 = vrot.slane %v1143, %v1167
    %v1169 = vlaneseq
    %v1170 = vshrl.u32 %v1169, 7
    %v1171 = vsub.s32 6, %v1170
    %v1172 = vrot.slane %v1143, %v1171
    %v1173 = vlaneseq
    %v1174 = vshrl.u32 %v1173, 7
    %v1175 = vsub.s32 7, %v1174
    %v1176 = vrot.slane %v1143, %v1175
    %v1249 = vunpack.c.l.b16 %v1079
    %v1250 = vunpack.c.h.b16 %v1079
    %v1251 = vunpack.c.l.b16 %v1080
    %v1252 = vunpack.c.h.b16 %v1080
    %v1253 = vunpack.c.l.b16 %v1081
    %v1254 = vunpack.c.h.b16 %v1081
    %v1255 = vunpack.c.l.b16 %v1082
    %v1256 = vunpack.c.h.b16 %v1082
    %v1257 = vunpack.c.l.b16 %v1083
    %v1258 = vunpack.c.h.b16 %v1083
    %v1259 = vunpack.c.l.b16 %v1084
    %v1260 = vunpack.c.h.b16 %v1084
    %v1261 = vunpack.c.l.b16 %v1085
    %v1262 = vunpack.c.h.b16 %v1085
    %v1263 = vunpack.c.l.b16 %v1086
    %v1264 = vunpack.c.h.b16 %v1086
    %v1265 = vunpack.c.l.b16 %v1087
    %v1266 = vunpack.c.h.b16 %v1087
    %v1267 = vunpack.c.l.b16 %v1088
    %v1268 = vunpack.c.h.b16 %v1088
    %v1269 = vunpack.c.l.b16 %v1089
    %v1270 = vunpack.c.h.b16 %v1089
    %v1271 = vunpack.c.l.b16 %v1090
    %v1272 = vunpack.c.h.b16 %v1090
    %v1273 = vunpack.c.l.b16 %v1091
    %v1274 = vunpack.c.h.b16 %v1091
    %v1275 = vunpack.c.l.b16 %v1092
    %v1276 = vunpack.c.h.b16 %v1092
    %v1277 = vunpack.c.l.b16 %v1093
    %v1278 = vunpack.c.h.b16 %v1093
    %v1279 = vunpack.c.l.b16 %v1094
    %v1280 = vunpack.c.h.b16 %v1094
    %v1281 = vunpack.c.l.b16 %v1095
    %v1282 = vunpack.c.h.b16 %v1095
    %v1283 = vunpack.c.l.b16 %v1096
    %v1284 = vunpack.c.h.b16 %v1096
    %v1285 = vunpack.c.l.b16 %v1097
    %v1286 = vunpack.c.h.b16 %v1097
    %v1287 = vunpack.c.l.b16 %v1098
    %v1288 = vunpack.c.h.b16 %v1098
    %v1289 = vunpack.c.l.b16 %v1099
    %v1290 = vunpack.c.h.b16 %v1099
    %v1291 = vunpack.c.l.b16 %v1100
    %v1292 = vunpack.c.h.b16 %v1100
    %v1293 = vunpack.c.l.b16 %v1101
    %v1294 = vunpack.c.h.b16 %v1101
    %v1295 = vunpack.c.l.b16 %v1102
    %v1296 = vunpack.c.h.b16 %v1102
    %v1297 = vunpack.c.l.b16 %v1103
    %v1298 = vunpack.c.h.b16 %v1103
    %v1299 = vunpack.c.l.b16 %v1104
    %v1300 = vunpack.c.h.b16 %v1104
    %v1301 = vunpack.c.l.b16 %v1105
    %v1302 = vunpack.c.h.b16 %v1105
    %v1303 = vunpack.c.l.b16 %v1106
    %v1304 = vunpack.c.h.b16 %v1106
    %v1305 = vunpack.c.l.b16 %v1107
    %v1306 = vunpack.c.h.b16 %v1107
    %v1307 = vunpack.c.l.b16 %v1108
    %v1308 = vunpack.c.h.b16 %v1108
    %v1309 = vunpack.c.l.b16 %v1109
    %v1310 = vunpack.c.h.b16 %v1109
    %v1311 = vunpack.c.l.b16 %v1110
    %v1312 = vunpack.c.h.b16 %v1110
    %v1313 = vunpack.c.l.b16 %v1111
    %v1314 = vunpack.c.h.b16 %v1111
    %v1315 = vunpack.c.l.b16 %v1112
    %v1316 = vunpack.c.h.b16 %v1112
    %v1317 = vunpack.c.l.b16 %v1113
    %v1318 = vunpack.c.h.b16 %v1113
    %v1319 = vunpack.c.l.b16 %v1114
    %v1320 = vunpack.c.h.b16 %v1114
    %v1321 = vunpack.c.l.b16 %v1115
    %v1322 = vunpack.c.h.b16 %v1115
    %v1323 = vunpack.c.l.b16 %v1116
    %v1324 = vunpack.c.h.b16 %v1116
    %v1325 = vunpack.c.l.b16 %v1117
    %v1326 = vunpack.c.h.b16 %v1117
    %v1327 = vunpack.c.l.b16 %v1118
    %v1328 = vunpack.c.h.b16 %v1118
    %v1329 = vunpack.c.l.b16 %v1119
    %v1330 = vunpack.c.h.b16 %v1119
    %v1331 = vunpack.c.l.b16 %v1120
    %v1332 = vunpack.c.h.b16 %v1120
    %v1333 = vunpack.c.l.b16 %v1121
    %v1334 = vunpack.c.h.b16 %v1121
    %v1335 = vunpack.c.l.b16 %v1122
    %v1336 = vunpack.c.h.b16 %v1122
    %v1337 = vunpack.c.l.b16 %v1123
    %v1338 = vunpack.c.h.b16 %v1123
    %v1339 = vunpack.c.l.b16 %v1124
    %v1340 = vunpack.c.h.b16 %v1124
    %v1341 = vunpack.c.l.b16 %v1125
    %v1342 = vunpack.c.h.b16 %v1125
    %v1343 = vunpack.c.l.b16 %v1126
    %v1344 = vunpack.c.h.b16 %v1126
    %v1345 = vunpack.c.l.b16 %v1127
    %v1346 = vunpack.c.h.b16 %v1127
    %v1347 = vunpack.c.l.b16 %v1128
    %v1348 = vunpack.c.h.b16 %v1128
    %v1349 = vunpack.c.l.b16 %v1129
    %v1350 = vunpack.c.h.b16 %v1129
    %v1351 = vunpack.c.l.b16 %v1130
    %v1352 = vunpack.c.h.b16 %v1130
    %v1353 = vunpack.c.l.b16 %v1131
    %v1354 = vunpack.c.h.b16 %v1131
    %v1355 = vunpack.c.l.b16 %v1132
    %v1356 = vunpack.c.h.b16 %v1132
    %v1357 = vunpack.c.l.b16 %v1133
    %v1358 = vunpack.c.h.b16 %v1133
    %v1359 = vunpack.c.l.b16 %v1134
    %v1360 = vunpack.c.h.b16 %v1134
    %v1361 = vunpack.c.l.b16 %v1135
    %v1362 = vunpack.c.h.b16 %v1135
    %v1363 = vunpack.c.l.b16 %v1136
    %v1364 = vunpack.c.h.b16 %v1136
    %v1365 = vunpack.c.l.b16 %v1137
    %v1366 = vunpack.c.h.b16 %v1137
    %v1367 = vunpack.c.l.b16 %v1138
    %v1368 = vunpack.c.h.b16 %v1138
    %v1369 = vunpack.c.l.b16 %v1139
    %v1370 = vunpack.c.h.b16 %v1139
    %v1371 = vunpack.c.l.b16 %v1140
    %v1372 = vunpack.c.h.b16 %v1140
    %v1373 = vunpack.c.l.b16 %v1141
    %v1374 = vunpack.c.h.b16 %v1141
    %v1375 = vunpack.c.l.b16 %v1142
    %v1376 = vunpack.c.h.b16 %v1142
    %v1377 = vpack.c.b16 %v1257, %v1249
    %v1378 = vpack.c.b16 %v1258, %v1250
    %v1379 = vpack.c.b16 %v1259, %v1251
    %v1380 = vpack.c.b16 %v1260, %v1252
    %v1381 = vpack.c.b16 %v1261, %v1253
    %v1382 = vpack.c.b16 %v1262, %v1254
    %v1383 = vpack.c.b16 %v1263, %v1255
    %v1384 = vpack.c.b16 %v1264, %v1256
    %v1385 = vpack.c.b16 %v1273, %v1265
    %v1386 = vpack.c.b16 %v1274, %v1266
    %v1387 = vpack.c.b16 %v1275, %v1267
    %v1388 = vpack.c.b16 %v1276, %v1268
    %v1389 = vpack.c.b16 %v1277, %v1269
    %v1390 = vpack.c.b16 %v1278, %v1270
    %v1391 = vpack.c.b16 %v1279, %v1271
    %v1392 = vpack.c.b16 %v1280, %v1272
    %v1393 = vpack.c.b16 %v1289, %v1281
    %v1394 = vpack.c.b16 %v1290, %v1282
    %v1395 = vpack.c.b16 %v1291, %v1283
    %v1396 = vpack.c.b16 %v1292, %v1284
    %v1397 = vpack.c.b16 %v1293, %v1285
    %v1398 = vpack.c.b16 %v1294, %v1286
    %v1399 = vpack.c.b16 %v1295, %v1287
    %v1400 = vpack.c.b16 %v1296, %v1288
    %v1401 = vpack.c.b16 %v1305, %v1297
    %v1402 = vpack.c.b16 %v1306, %v1298
    %v1403 = vpack.c.b16 %v1307, %v1299
    %v1404 = vpack.c.b16 %v1308, %v1300
    %v1405 = vpack.c.b16 %v1309, %v1301
    %v1406 = vpack.c.b16 %v1310, %v1302
    %v1407 = vpack.c.b16 %v1311, %v1303
    %v1408 = vpack.c.b16 %v1312, %v1304
    %v1409 = vpack.c.b16 %v1321, %v1313
    %v1410 = vpack.c.b16 %v1322, %v1314
    %v1411 = vpack.c.b16 %v1323, %v1315
    %v1412 = vpack.c.b16 %v1324, %v1316
    %v1413 = vpack.c.b16 %v1325, %v1317
    %v1414 = vpack.c.b16 %v1326, %v1318
    %v1415 = vpack.c.b16 %v1327, %v1319
    %v1416 = vpack.c.b16 %v1328, %v1320
    %v1417 = vpack.c.b16 %v1337, %v1329
    %v1418 = vpack.c.b16 %v1338, %v1330
    %v1419 = vpack.c.b16 %v1339, %v1331
    %v1420 = vpack.c.b16 %v1340, %v1332
    %v1421 = vpack.c.b16 %v1341, %v1333
    %v1422 = vpack.c.b16 %v1342, %v1334
    %v1423 = vpack.c.b16 %v1343, %v1335
    %v1424 = vpack.c.b16 %v1344, %v1336
    %v1425 = vpack.c.b16 %v1353, %v1345
    %v1426 = vpack.c.b16 %v1354, %v1346
    %v1427 = vpack.c.b16 %v1355, %v1347
    %v1428 = vpack.c.b16 %v1356, %v1348
    %v1429 = vpack.c.b16 %v1357, %v1349
    %v1430 = vpack.c.b16 %v1358, %v1350
    %v1431 = vpack.c.b16 %v1359, %v1351
    %v1432 = vpack.c.b16 %v1360, %v1352
    %v1433 = vpack.c.b16 %v1369, %v1361
    %v1434 = vpack.c.b16 %v1370, %v1362
    %v1435 = vpack.c.b16 %v1371, %v1363
    %v1436 = vpack.c.b16 %v1372, %v1364
    %v1437 = vpack.c.b16 %v1373, %v1365
    %v1438 = vpack.c.b16 %v1374, %v1366
    %v1439 = vpack.c.b16 %v1375, %v1367
    %v1440 = vpack.c.b16 %v1376, %v1368
    %1505 = vmatprep.subr.bf16.mxu0 %v1434
    %1506 = vmatpush1.bf16.msra.mxu0 %v1433
    %1507 = vmatprep.subr.bf16.mxu0 %v1426
    %1508 = vmatpush1.bf16.msra.mxu0 %v1425
    %1509 = vmatprep.subr.bf16.mxu0 %v1418
    %1510 = vmatpush1.bf16.msra.mxu0 %v1417
    %1511 = vmatprep.subr.bf16.mxu0 %v1410
    %1512 = vmatpush1.bf16.msra.mxu0 %v1409
    %1513 = vmatprep.subr.bf16.mxu0 %v1402
    %1514 = vmatpush1.bf16.msra.mxu0 %v1401
    %1515 = vmatprep.subr.bf16.mxu0 %v1394
    %1516 = vmatpush1.bf16.msra.mxu0 %v1393
    %1517 = vmatprep.subr.bf16.mxu0 %v1386
    %1518 = vmatpush1.bf16.msra.mxu0 %v1385
    %1519 = vmatprep.subr.bf16.mxu0 %v1378
    %1520 = vmatpush1.bf16.msra.mxu0 %v1377
    %1521 = vmatprep.subr.bf16.mxu0 0
    %1522 = vmatpush2.bf16.msra.mxu0 0
    %1523 = vmatprep.subr.bf16.mxu0 0
    %1524 = vmatpush2.bf16.msra.mxu0 0
    %1525 = vmatprep.subr.bf16.mxu0 0
    %1526 = vmatpush2.bf16.msra.mxu0 0
    %1527 = vmatprep.subr.bf16.mxu0 0
    %1528 = vmatpush2.bf16.msra.mxu0 0
    %1529 = vmatprep.subr.bf16.mxu0 0
    %1530 = vmatpush2.bf16.msra.mxu0 0
    %1531 = vmatprep.subr.bf16.mxu0 0
    %1532 = vmatpush2.bf16.msra.mxu0 0
    %1533 = vmatprep.subr.bf16.mxu0 0
    %1534 = vmatpush2.bf16.msra.mxu0 0
    %1535 = vmatprep.subr.bf16.mxu0 0
    %1536 = vmatpush2.bf16.msra.mxu0 0
    %1537 = vmatprep.mubr.bf16.mxu0 0
    %1538 = vmatmul.mubr.bf16.gmra.mxu0 %v1078
    %v1539 = vpop.f32.mrf.mxu0
    %v1540 = vadd.f32 %v1148, %v1539
    %v1541 = vpop.f32.mrf.mxu0
    %v1542 = vadd.f32 %v1152, %v1541
    %v1543 = vpop.f32.mrf.mxu0
    %v1544 = vadd.f32 %v1148, %v1543
    %v1545 = vpop.f32.mrf.mxu0
    %v1546 = vadd.f32 %v1152, %v1545
    %1547 = vdwg.mxu0
    %1548 = vmatprep.subr.bf16.mxu0 %v1436
    %1549 = vmatpush1.bf16.msra.mxu0 %v1435
    %1550 = vmatprep.subr.bf16.mxu0 %v1428
    %1551 = vmatpush1.bf16.msra.mxu0 %v1427
    %1552 = vmatprep.subr.bf16.mxu0 %v1420
    %1553 = vmatpush1.bf16.msra.mxu0 %v1419
    %1554 = vmatprep.subr.bf16.mxu0 %v1412
    %1555 = vmatpush1.bf16.msra.mxu0 %v1411
    %1556 = vmatprep.subr.bf16.mxu0 %v1404
    %1557 = vmatpush1.bf16.msra.mxu0 %v1403
    %1558 = vmatprep.subr.bf16.mxu0 %v1396
    %1559 = vmatpush1.bf16.msra.mxu0 %v1395
    %1560 = vmatprep.subr.bf16.mxu0 %v1388
    %1561 = vmatpush1.bf16.msra.mxu0 %v1387
    %1562 = vmatprep.subr.bf16.mxu0 %v1380
    %1563 = vmatpush1.bf16.msra.mxu0 %v1379
    %1564 = vmatprep.subr.bf16.mxu0 0
    %1565 = vmatpush2.bf16.msra.mxu0 0
    %1566 = vmatprep.subr.bf16.mxu0 0
    %1567 = vmatpush2.bf16.msra.mxu0 0
    %1568 = vmatprep.subr.bf16.mxu0 0
    %1569 = vmatpush2.bf16.msra.mxu0 0
    %1570 = vmatprep.subr.bf16.mxu0 0
    %1571 = vmatpush2.bf16.msra.mxu0 0
    %1572 = vmatprep.subr.bf16.mxu0 0
    %1573 = vmatpush2.bf16.msra.mxu0 0
    %1574 = vmatprep.subr.bf16.mxu0 0
    %1575 = vmatpush2.bf16.msra.mxu0 0
    %1576 = vmatprep.subr.bf16.mxu0 0
    %1577 = vmatpush2.bf16.msra.mxu0 0
    %1578 = vmatprep.subr.bf16.mxu0 0
    %1579 = vmatpush2.bf16.msra.mxu0 0
    %1580 = vmatprep.mubr.bf16.mxu0 0
    %1581 = vmatmul.mubr.bf16.gmra.mxu0 %v1078
    %v1582 = vpop.f32.mrf.mxu0
    %v1583 = vadd.f32 %v1156, %v1582
    %v1584 = vpop.f32.mrf.mxu0
    %v1585 = vadd.f32 %v1160, %v1584
    %v1586 = vpop.f32.mrf.mxu0
    %v1587 = vadd.f32 %v1156, %v1586
    %v1588 = vpop.f32.mrf.mxu0
    %v1589 = vadd.f32 %v1160, %v1588
    %1590 = vdwg.mxu0
    %1591 = vmatprep.subr.bf16.mxu0 %v1438
    %1592 = vmatpush1.bf16.msra.mxu0 %v1437
    %1593 = vmatprep.subr.bf16.mxu0 %v1430
    %1594 = vmatpush1.bf16.msra.mxu0 %v1429
    %1595 = vmatprep.subr.bf16.mxu0 %v1422
    %1596 = vmatpush1.bf16.msra.mxu0 %v1421
    %1597 = vmatprep.subr.bf16.mxu0 %v1414
    %1598 = vmatpush1.bf16.msra.mxu0 %v1413
    %1599 = vmatprep.subr.bf16.mxu0 %v1406
    %1600 = vmatpush1.bf16.msra.mxu0 %v1405
    %1601 = vmatprep.subr.bf16.mxu0 %v1398
    %1602 = vmatpush1.bf16.msra.mxu0 %v1397
    %1603 = vmatprep.subr.bf16.mxu0 %v1390
    %1604 = vmatpush1.bf16.msra.mxu0 %v1389
    %1605 = vmatprep.subr.bf16.mxu0 %v1382
    %1606 = vmatpush1.bf16.msra.mxu0 %v1381
    %1607 = vmatprep.subr.bf16.mxu0 0
    %1608 = vmatpush2.bf16.msra.mxu0 0
    %1609 = vmatprep.subr.bf16.mxu0 0
    %1610 = vmatpush2.bf16.msra.mxu0 0
    %1611 = vmatprep.subr.bf16.mxu0 0
    %1612 = vmatpush2.bf16.msra.mxu0 0
    %1613 = vmatprep.subr.bf16.mxu0 0
    %1614 = vmatpush2.bf16.msra.mxu0 0
    %1615 = vmatprep.subr.bf16.mxu0 0
    %1616 = vmatpush2.bf16.msra.mxu0 0
    %1617 = vmatprep.subr.bf16.mxu0 0
    %1618 = vmatpush2.bf16.msra.mxu0 0
    %1619 = vmatprep.subr.bf16.mxu0 0
    %1620 = vmatpush2.bf16.msra.mxu0 0
    %1621 = vmatprep.subr.bf16.mxu0 0
    %1622 = vmatpush2.bf16.msra.mxu0 0
    %1623 = vmatprep.mubr.bf16.mxu0 0
    %1624 = vmatmul.mubr.bf16.gmra.mxu0 %v1078
    %v1625 = vpop.f32.mrf.mxu0
    %v1626 = vadd.f32 %v1164, %v1625
    %v1627 = vpop.f32.mrf.mxu0
    %v1628 = vadd.f32 %v1168, %v1627
    %v1629 = vpop.f32.mrf.mxu0
    %v1630 = vadd.f32 %v1164, %v1629
    %v1631 = vpop.f32.mrf.mxu0
    %v1632 = vadd.f32 %v1168, %v1631
    %1633 = vdwg.mxu0
    %1634 = vmatprep.subr.bf16.mxu0 %v1440
    %1635 = vmatpush1.bf16.msra.mxu0 %v1439
    %1636 = vmatprep.subr.bf16.mxu0 %v1432
    %1637 = vmatpush1.bf16.msra.mxu0 %v1431
    %1638 = vmatprep.subr.bf16.mxu0 %v1424
    %1639 = vmatpush1.bf16.msra.mxu0 %v1423
    %1640 = vmatprep.subr.bf16.mxu0 %v1416
    %1641 = vmatpush1.bf16.msra.mxu0 %v1415
    %1642 = vmatprep.subr.bf16.mxu0 %v1408
    %1643 = vmatpush1.bf16.msra.mxu0 %v1407
    %1644 = vmatprep.subr.bf16.mxu0 %v1400
    %1645 = vmatpush1.bf16.msra.mxu0 %v1399
    %1646 = vmatprep.subr.bf16.mxu0 %v1392
    %1647 = vmatpush1.bf16.msra.mxu0 %v1391
    %1648 = vmatprep.subr.bf16.mxu0 %v1384
    %1649 = vmatpush1.bf16.msra.mxu0 %v1383
    %1650 = vmatprep.subr.bf16.mxu0 0
    %1651 = vmatpush2.bf16.msra.mxu0 0
    %1652 = vmatprep.subr.bf16.mxu0 0
    %1653 = vmatpush2.bf16.msra.mxu0 0
    %1654 = vmatprep.subr.bf16.mxu0 0
    %1655 = vmatpush2.bf16.msra.mxu0 0
    %1656 = vmatprep.subr.bf16.mxu0 0
    %1657 = vmatpush2.bf16.msra.mxu0 0
    %1658 = vmatprep.subr.bf16.mxu0 0
    %1659 = vmatpush2.bf16.msra.mxu0 0
    %1660 = vmatprep.subr.bf16.mxu0 0
    %1661 = vmatpush2.bf16.msra.mxu0 0
    %1662 = vmatprep.subr.bf16.mxu0 0
    %1663 = vmatpush2.bf16.msra.mxu0 0
    %1664 = vmatprep.subr.bf16.mxu0 0
    %1665 = vmatpush2.bf16.msra.mxu0 0
    %1666 = vmatprep.mubr.bf16.mxu0 0
    %1667 = vmatmul.mubr.bf16.gmra.mxu0 %v1078
    %v1668 = vpop.f32.mrf.mxu0
    %v1669 = vadd.f32 %v1172, %v1668
    %v1670 = vpop.f32.mrf.mxu0
    %v1671 = vadd.f32 %v1176, %v1670
    %v1672 = vpop.f32.mrf.mxu0
    %v1673 = vadd.f32 %v1172, %v1672
    %v1674 = vpop.f32.mrf.mxu0
    %v1675 = vadd.f32 %v1176, %v1674
    %1676 = vdwg.mxu0
    %v1677 = vxor.u32 %v1540, 2147483648
    %v1678 = vxor.u32 %v1542, 2147483648
    %v1679 = vxor.u32 %v1583, 2147483648
    %v1680 = vxor.u32 %v1585, 2147483648
    %v1681 = vxor.u32 %v1626, 2147483648
    %v1682 = vxor.u32 %v1628, 2147483648
    %v1683 = vxor.u32 %v1669, 2147483648
    %v1684 = vxor.u32 %v1671, 2147483648
    %v1685 = vxor.u32 %v1544, 2147483648
    %v1686 = vxor.u32 %v1546, 2147483648
    %v1687 = vxor.u32 %v1587, 2147483648
    %v1688 = vxor.u32 %v1589, 2147483648
    %v1689 = vxor.u32 %v1630, 2147483648
    %v1690 = vxor.u32 %v1632, 2147483648
    %v1691 = vxor.u32 %v1673, 2147483648
    %v1692 = vxor.u32 %v1675, 2147483648
    %v1693 = vmul.f32 %v1677, 1.442695
    %v1694 = vpow.pop %v1693
    %v1695 = vmul.f32 %v1678, 1.442695
    %v1696 = vpow.pop %v1695
    %v1697 = vmul.f32 %v1679, 1.442695
    %v1698 = vpow.pop %v1697
    %v1699 = vmul.f32 %v1680, 1.442695
    %v1700 = vpow.pop %v1699
    %v1701 = vmul.f32 %v1681, 1.442695
    %v1702 = vpow.pop %v1701
    %v1703 = vmul.f32 %v1682, 1.442695
    %v1704 = vpow.pop %v1703
    %v1705 = vmul.f32 %v1683, 1.442695
    %v1706 = vpow.pop %v1705
    %v1707 = vmul.f32 %v1684, 1.442695
    %v1708 = vpow.pop %v1707
    %v1709 = vmul.f32 %v1685, 1.442695
    %v1710 = vpow.pop %v1709
    %v1711 = vmul.f32 %v1686, 1.442695
    %v1712 = vpow.pop %v1711
    %v1713 = vmul.f32 %v1687, 1.442695
    %v1714 = vpow.pop %v1713
    %v1715 = vmul.f32 %v1688, 1.442695
    %v1716 = vpow.pop %v1715
    %v1717 = vmul.f32 %v1689, 1.442695
    %v1718 = vpow.pop %v1717
    %v1719 = vmul.f32 %v1690, 1.442695
    %v1720 = vpow.pop %v1719
    %v1721 = vmul.f32 %v1691, 1.442695
    %v1722 = vpow.pop %v1721
    %v1723 = vmul.f32 %v1692, 1.442695
    %v1724 = vpow.pop %v1723
    %v1725 = vadd.f32 %v1694, 1.0
    %v1726 = vadd.f32 %v1696, 1.0
    %v1727 = vadd.f32 %v1698, 1.0
    %v1728 = vadd.f32 %v1700, 1.0
    %v1729 = vadd.f32 %v1702, 1.0
    %v1730 = vadd.f32 %v1704, 1.0
    %v1731 = vadd.f32 %v1706, 1.0
    %v1732 = vadd.f32 %v1708, 1.0
    %v1733 = vadd.f32 %v1710, 1.0
    %v1734 = vadd.f32 %v1712, 1.0
    %v1735 = vadd.f32 %v1714, 1.0
    %v1736 = vadd.f32 %v1716, 1.0
    %v1737 = vadd.f32 %v1718, 1.0
    %v1738 = vadd.f32 %v1720, 1.0
    %v1739 = vadd.f32 %v1722, 1.0
    %v1740 = vadd.f32 %v1724, 1.0
    %v1741 = vrcp.pop %v1725
    %v1742 = vmul.f32 1.0, %v1741
    %v1743 = vrcp.pop %v1726
    %v1744 = vmul.f32 1.0, %v1743
    %v1745 = vrcp.pop %v1727
    %v1746 = vmul.f32 1.0, %v1745
    %v1747 = vrcp.pop %v1728
    %v1748 = vmul.f32 1.0, %v1747
    %v1749 = vrcp.pop %v1729
    %v1750 = vmul.f32 1.0, %v1749
    %v1751 = vrcp.pop %v1730
    %v1752 = vmul.f32 1.0, %v1751
    %v1753 = vrcp.pop %v1731
    %v1754 = vmul.f32 1.0, %v1753
    %v1755 = vrcp.pop %v1732
    %v1756 = vmul.f32 1.0, %v1755
    %v1757 = vrcp.pop %v1733
    %v1758 = vmul.f32 1.0, %v1757
    %v1759 = vrcp.pop %v1734
    %v1760 = vmul.f32 1.0, %v1759
    %v1761 = vrcp.pop %v1735
    %v1762 = vmul.f32 1.0, %v1761
    %v1763 = vrcp.pop %v1736
    %v1764 = vmul.f32 1.0, %v1763
    %v1765 = vrcp.pop %v1737
    %v1766 = vmul.f32 1.0, %v1765
    %v1767 = vrcp.pop %v1738
    %v1768 = vmul.f32 1.0, %v1767
    %v1769 = vrcp.pop %v1739
    %v1770 = vmul.f32 1.0, %v1769
    %v1771 = vrcp.pop %v1740
    %v1772 = vmul.f32 1.0, %v1771
    %v1773 = vpack.c.bf16 %v1758, %v1742
    %v1774 = vpack.c.bf16 %v1760, %v1744
    %v1775 = vpack.c.bf16 %v1762, %v1746
    %v1776 = vpack.c.bf16 %v1764, %v1748
    %v1777 = vpack.c.bf16 %v1766, %v1750
    %v1778 = vpack.c.bf16 %v1768, %v1752
    %v1779 = vpack.c.bf16 %v1770, %v1754
    %v1780 = vpack.c.bf16 %v1772, %v1756
    %v1789 = vunpack.c.l.b16 %v1773
    %v1790 = vunpack.c.l.b16 %v1774
    %v1791 = vunpack.c.l.b16 %v1775
    %v1792 = vunpack.c.l.b16 %v1776
    %v1793 = vunpack.c.l.b16 %v1777
    %v1794 = vunpack.c.l.b16 %v1778
    %v1795 = vunpack.c.l.b16 %v1779
    %v1796 = vunpack.c.l.b16 %v1780
    %v1797 = vunpack.c.h.b16 %v1773
    %v1798 = vunpack.c.h.b16 %v1774
    %v1799 = vunpack.c.h.b16 %v1775
    %v1800 = vunpack.c.h.b16 %v1776
    %v1801 = vunpack.c.h.b16 %v1777
    %v1802 = vunpack.c.h.b16 %v1778
    %v1803 = vunpack.c.h.b16 %v1779
    %v1804 = vunpack.c.h.b16 %v1780
    %v1805 = vpack.c.b16 %v1790, %v1789
    %v1806 = vpack.c.b16 %v1792, %v1791
    %v1807 = vpack.c.b16 %v1794, %v1793
    %v1808 = vpack.c.b16 %v1796, %v1795
    %v1809 = vpack.c.b16 %v1798, %v1797
    %v1810 = vpack.c.b16 %v1800, %v1799
    %v1811 = vpack.c.b16 %v1802, %v1801
    %v1812 = vpack.c.b16 %v1804, %v1803
    %1821 = vst [vmem:[%s10] sm:$0xff] %v1805
    %1822 = vst [vmem:[%s10 + $0x8] sm:$0xff] %v1806
    %1823 = vst [vmem:[%s10 + $0x10] sm:$0xff] %v1807
    %1824 = vst [vmem:[%s10 + $0x18] sm:$0xff] %v1808
    %1825 = vst [vmem:[%s10 + $0x20] sm:$0xff] %v1809
    %1826 = vst [vmem:[%s10 + $0x28] sm:$0xff] %v1810
    %1827 = vst [vmem:[%s10 + $0x30] sm:$0xff] %v1811
    %1828 = vst [vmem:[%s10 + $0x38] sm:$0xff] %v1812
    %1829 = vst [vmem:[%s11] sm:$0xff] %v943
    %1830 = vst [vmem:[%s11 + $0x8] sm:$0xff] %v945
    %1831 = vst [vmem:[%s11 + $0x10] sm:$0xff] %v947
    %1832 = vst [vmem:[%s11 + $0x18] sm:$0xff] %v949
    // Predicated region
    $region50: #{vae_forward.1} parent=1 // pred_check
      _
    $region51: #{vae_forward.1} parent=1 // pred_check_branch
      %1834 = sbr.rel (0) target = $region53
    $region52: #{vae_forward.1} parent=1 // pred_region
      _
    $region53: #{vae_forward.1} parent=1 // pred_fallthru
      _
    // Predicated region
    $region54: #{vae_forward.1} parent=1 // pred_check
      _
    $region55: #{vae_forward.1} parent=1 // pred_check_branch
      %1836 = sbr.rel (0) target = $region57
    $region56: #{vae_forward.1} parent=1 // pred_region
      _
    $region57: #{vae_forward.1} parent=1 // pred_fallthru
      _
    // Predicated region
    $region58: #{vae_forward.1} parent=1 // pred_check
      _
    $region59: #{vae_forward.1} parent=1 // pred_check_branch
      %1838 = sbr.rel (0) target = $region61
    $region60: #{vae_forward.1} parent=1 // pred_region
      _
    $region61: #{vae_forward.1} parent=1 // pred_fallthru
      _
    // Predicated region
    $region62: #{vae_forward.1} parent=1 // pred_check
      _
    $region63: #{vae_forward.1} parent=1 // pred_check_branch
      %1840 = sbr.rel (0) target = $region65
    $region64: #{vae_forward.1} parent=1 // pred_region
      _
    $region65: #{vae_forward.1} parent=1 // pred_fallthru
      _
    %1841 = vsyncpa [#allocation3], 1
    %1842 = vsyncpa [#allocation5], 1

</llo_original>
